<compile_context>
chip_gen: v6e
topology: v6e:2x2x1
jax: 0.10.0
libtpu: 0.0.40
codegen_flags: <defaults>
</compile_context>

<pallas_src>
import numpy as np
import jax
import jax.numpy as jnp
from jax.experimental import pallas as pl
from jax.experimental.pallas import tpu as pltpu


# --------------------------------------------------------------------------------------
# Single fused kernel: LSTM (unrolled over time) -> causal conv block -> residual -> head.
# --------------------------------------------------------------------------------------
def generator_kernel(x_ref, wih_ref, whh_ref, b_ref,
                     w1a_ref, w1b_ref, b1_ref, wr_ref, br_ref,
                     w2a_ref, w2b_ref, b2_ref, wl_ref, bl_ref,
                     out_ref):
    B, S, D = x_ref.shape
    H = whh_ref.shape[0]

    # ---- LSTM -------------------------------------------------------------------------
    # Hoisted input projection: one matmul for all timesteps (bias fused in).
    xw = (jnp.dot(x_ref[...].reshape(B * S, D), wih_ref[...],
                  preferred_element_type=jnp.float32)
          + b_ref[...]).reshape(B, S, 4 * H)

    whh = whh_ref[...]
    h = jnp.zeros((B, H), jnp.float32)
    c = jnp.zeros((B, H), jnp.float32)
    hs = []
    for t in range(S):  # fully unrolled recurrence; only h @ Whh is serial
        gates = xw[:, t, :] + jnp.dot(h, whh, preferred_element_type=jnp.float32)
        # full-width activations (one EUP pass each), then slice
        sg = pl.reciprocal(1.0 + jnp.exp(-gates), approx=True)   # sigmoid(gates)
        th = jnp.tanh(gates)
        i = sg[:, 0 * H:1 * H]
        f = sg[:, 1 * H:2 * H]
        g = th[:, 2 * H:3 * H]
        o = sg[:, 3 * H:4 * H]
        c = f * c + i * g
        h = o * jnp.tanh(c)
        hs.append(h)

    # rec kept entirely in vregs, time-major: row r = t*B + b
    rec = jnp.concatenate(hs, axis=0)                    # (S*B, H)

    # ---- causal block + head, flattened time-major (S*B, .) layout ----------------------
    # Shift by one timestep == roll by B rows; rows of the first timestep (row < B) are
    # zeroed, which also removes the wraparound of the roll.  Mask hoisted & shared.
    row = jax.lax.broadcasted_iota(jnp.int32, (S * B, 1), 0)
    not_first = row >= B

    def causal_shift(a):
        return jnp.where(not_first, pltpu.roll(a, shift=B, axis=0), 0.0)

    # conv1 (K=2): prev-tap + cur-tap dots; resample (1x1) on rec (no relu on residual).
    x_prev = causal_shift(rec)
    h1 = jnp.maximum(
        jnp.dot(x_prev, w1a_ref[...], preferred_element_type=jnp.float32)
        + jnp.dot(rec, w1b_ref[...], preferred_element_type=jnp.float32)
        + b1_ref[...], 0.0)                              # relu1 (+ identity dropout)
    res = (jnp.dot(rec, wr_ref[...], preferred_element_type=jnp.float32)
           + br_ref[...])

    # conv2 (K=2)
    h1_prev = causal_shift(h1)
    h2 = jnp.maximum(
        jnp.dot(h1_prev, w2a_ref[...], preferred_element_type=jnp.float32)
        + jnp.dot(h1, w2b_ref[...], preferred_element_type=jnp.float32)
        + b2_ref[...], 0.0)                              # relu2 (+ identity dropout)

    y1 = jnp.maximum(h2 + res, 0.0)                      # _Block output, (S*B, C)

    # linear_2 + relu head: VPU multiply + lane reduction (no N=1 MXU push).
    j = jnp.sum(y1 * wl_ref[...], axis=-1, keepdims=True) + bl_ref[...]
    out_ref[...] = jnp.maximum(j, 0.0)                   # (S*B, 1), time-major


# --------------------------------------------------------------------------------------
# One-time weight repacking (run ONCE, outside the per-call jit).
# --------------------------------------------------------------------------------------
def prepare_params(p):
    f32 = jnp.float32
    return dict(
        wih_t=jnp.asarray(p["wih"].T, f32),                       # (D, 4H)
        whh_t=jnp.asarray(p["whh"].T, f32),                       # (H, 4H)
        b=jnp.asarray((p["bih"] + p["bhh"]).reshape(1, -1), f32),  # (1, 4H)
        w1a=jnp.asarray(p["w1"][:, :, 0].T, f32),                 # (H, C)  prev tap
        w1b=jnp.asarray(p["w1"][:, :, 1].T, f32),                 # (H, C)  cur tap
        b1=jnp.asarray(p["b1"].reshape(1, -1), f32),              # (1, C)
        wr=jnp.asarray(p["wr"][:, :, 0].T, f32),                  # (H, C)  resample
        br=jnp.asarray(p["br"].reshape(1, -1), f32),              # (1, C)
        w2a=jnp.asarray(p["w2"][:, :, 0].T, f32),                 # (C, C)
        w2b=jnp.asarray(p["w2"][:, :, 1].T, f32),                 # (C, C)
        b2=jnp.asarray(p["b2"].reshape(1, -1), f32),              # (1, C)
        wl=jnp.asarray(p["wl"].reshape(1, -1), f32),              # (1, C)
        bl=jnp.asarray(p["bl"].reshape(1, 1), f32),               # (1, 1)
    )


# --------------------------------------------------------------------------------------
# Wrapper: one grid-less pallas_call (everything resident in VMEM) + 64-byte reorder.
# --------------------------------------------------------------------------------------
def generator_forward(x, pp):
    B, S, D = x.shape
    vmem = pl.BlockSpec(memory_space=pltpu.MemorySpace.VMEM)
    out = pl.pallas_call(
        generator_kernel,
        out_shape=jax.ShapeDtypeStruct((S * B, 1), jnp.float32),
        in_specs=[vmem] * 14,
        out_specs=vmem,
    )(x, pp["wih_t"], pp["whh_t"], pp["b"],
      pp["w1a"], pp["w1b"], pp["b1"], pp["wr"], pp["br"],
      pp["w2a"], pp["w2b"], pp["b2"], pp["wl"], pp["bl"])
    # time-major (S*B, 1) -> (B, S, 1)
    return jnp.transpose(out.reshape(S, B))[:, :, None]


# --------------------------------------------------------------------------------------
# Pure-JAX reference for correctness checking.
# --------------------------------------------------------------------------------------
def reference_forward(x, p):
    B, S, D = x.shape
    H = p["whh"].shape[1]
    h = jnp.zeros((B, H), jnp.float32)
    c = jnp.zeros((B, H), jnp.float32)
    recs = []
    for t in range(S):
        gates = x[:, t, :] @ p["wih"].T + h @ p["whh"].T + p["bih"] + p["bhh"]
        i = jax.nn.sigmoid(gates[:, 0 * H:1 * H])
        f = jax.nn.sigmoid(gates[:, 1 * H:2 * H])
        g = jnp.tanh(gates[:, 2 * H:3 * H])
        o = jax.nn.sigmoid(gates[:, 3 * H:4 * H])
        c = f * c + i * g
        h = o * jnp.tanh(c)
        recs.append(h)
    rec = jnp.stack(recs, axis=1)                        # (B, S, H)

    def causal_conv2(a, w, b):                           # w: (Cout, Cin, 2)
        prev = jnp.concatenate([jnp.zeros_like(a[:, :1, :]), a[:, :-1, :]], axis=1)
        return prev @ w[:, :, 0].T + a @ w[:, :, 1].T + b

    h1 = jax.nn.relu(causal_conv2(rec, p["w1"], p["b1"]))
    h2 = jax.nn.relu(causal_conv2(h1, p["w2"], p["b2"]))
    res = rec @ p["wr"][:, :, 0].T + p["br"]
    y1 = jax.nn.relu(h2 + res)
    j = y1 @ p["wl"].T + p["bl"]
    return jax.nn.relu(j)


if __name__ == "__main__":
    B, S = 2, 8
    in_dim = 32
    hidden_dim = in_dim        # module only shape-consistent when hidden_dim == in_dim
    n_channel = 16
    K = 2                      # kernel_size

    key = jax.random.PRNGKey(0)
    ks = jax.random.split(key, 9)
    scale = 1.0 / np.sqrt(hidden_dim)

    params = {
        # nn.LSTM(in_dim, hidden_dim, 1, batch_first=True)
        "wih": jax.random.uniform(ks[0], (4 * hidden_dim, in_dim), jnp.float32, -scale, scale),
        "whh": jax.random.uniform(ks[1], (4 * hidden_dim, hidden_dim), jnp.float32, -scale, scale),
        "bih": jax.random.uniform(ks[2], (4 * hidden_dim,), jnp.float32, -scale, scale),
        "bhh": jax.random.uniform(ks[3], (4 * hidden_dim,), jnp.float32, -scale, scale),
        # _Block conv1 / conv2 / resample (weights filled per init_weights)
        "w1": jnp.full((n_channel, hidden_dim, K), 0.05, jnp.float32),
        "b1": 0.1 * jax.random.normal(ks[4], (n_channel,), jnp.float32),
        "w2": jnp.full((n_channel, n_channel, K), 0.05, jnp.float32),
        "b2": 0.1 * jax.random.normal(ks[5], (n_channel,), jnp.float32),
        "wr": jnp.full((n_channel, hidden_dim, 1), 0.05, jnp.float32),
        "br": 0.1 * jax.random.normal(ks[6], (n_channel,), jnp.float32),
        # linear_2 (weight filled with 0.5)
        "wl": jnp.full((1, n_channel), 0.5, jnp.float32),
        "bl": 0.1 * jax.random.normal(ks[7], (1,), jnp.float32),
    }

    x = jax.random.normal(ks[8], (B, S, in_dim), jnp.float32)

    packed = jax.tree_util.tree_map(jax.block_until_ready, prepare_params(params))  # one-time
    gen = jax.jit(generator_forward)

    out = gen(x, packed)
    out = jax.block_until_ready(out)

    ref = reference_forward(x, params)
    assert out.shape == (B, S, 1)
    # slightly loosened vs 1e-3 to cover the approx-reciprocal sigmoid on the LSTM path
    np.testing.assert_allclose(np.asarray(out), np.asarray(ref), rtol=2e-3, atol=2e-3)

    print("KERNEL_OK")
</pallas_src>

<mosaic_0001>
module attributes {stable_mosaic.version = 11 : i64} {
  func.func @generator_kernel(%arg0: memref<2x8x32xf32, #tpu.memory_space<vmem>>, %arg1: memref<32x128xf32, #tpu.memory_space<vmem>>, %arg2: memref<32x128xf32, #tpu.memory_space<vmem>>, %arg3: memref<1x128xf32, #tpu.memory_space<vmem>>, %arg4: memref<32x16xf32, #tpu.memory_space<vmem>>, %arg5: memref<32x16xf32, #tpu.memory_space<vmem>>, %arg6: memref<1x16xf32, #tpu.memory_space<vmem>>, %arg7: memref<32x16xf32, #tpu.memory_space<vmem>>, %arg8: memref<1x16xf32, #tpu.memory_space<vmem>>, %arg9: memref<16x16xf32, #tpu.memory_space<vmem>>, %arg10: memref<16x16xf32, #tpu.memory_space<vmem>>, %arg11: memref<1x16xf32, #tpu.memory_space<vmem>>, %arg12: memref<1x16xf32, #tpu.memory_space<vmem>>, %arg13: memref<1x1xf32, #tpu.memory_space<vmem>>, %arg14: memref<16x1xf32, #tpu.memory_space<vmem>>) attributes {dimension_semantics = [], scalar_prefetch = 0 : i64, scratch_operands = 0 : i64, tpu.core_type = #tpu.core_type<tc>} {
    %c0 = arith.constant 0 : index
    %c0_0 = arith.constant 0 : index
    %c0_1 = arith.constant 0 : index
    %0 = vector.load %arg0[%c0, %c0_0, %c0_1] : memref<2x8x32xf32, #tpu.memory_space<vmem>>, vector<2x8x32xf32>
    %1 = vector.shape_cast %0 : vector<2x8x32xf32> to vector<16x32xf32>
    %c0_2 = arith.constant 0 : index
    %c0_3 = arith.constant 0 : index
    %2 = vector.load %arg1[%c0_2, %c0_3] : memref<32x128xf32, #tpu.memory_space<vmem>>, vector<32x128xf32>
    %cst = arith.constant dense<0.000000e+00> : vector<16x128xf32>
    %3 = tpu.matmul %1, %2, %cst {dimension_numbers = #tpu.dot_dimension_numbers<[1], [0], [0], [1], [0, 0, 1, 1], [], []>} : vector<16x32xf32>, vector<32x128xf32>, vector<16x128xf32> -> vector<16x128xf32>
    %c0_4 = arith.constant 0 : index
    %c0_5 = arith.constant 0 : index
    %4 = vector.load %arg3[%c0_4, %c0_5] : memref<1x128xf32, #tpu.memory_space<vmem>>, vector<1x128xf32>
    %5 = vector.broadcast %4 : vector<1x128xf32> to vector<16x128xf32>
    %6 = arith.addf %3, %5 : vector<16x128xf32>
    %7 = vector.shape_cast %6 : vector<16x128xf32> to vector<2x8x128xf32>
    %c0_6 = arith.constant 0 : index
    %c0_7 = arith.constant 0 : index
    %8 = vector.load %arg2[%c0_6, %c0_7] : memref<32x128xf32, #tpu.memory_space<vmem>>, vector<32x128xf32>
    %cst_8 = arith.constant 0.000000e+00 : f32
    %9 = vector.broadcast %cst_8 : f32 to vector<2x32xf32>
    %cst_9 = arith.constant 0.000000e+00 : f32
    %10 = vector.broadcast %cst_9 : f32 to vector<2x32xf32>
    %11 = vector.extract_strided_slice %7 {offsets = [0, 0, 0], sizes = [2, 1, 128], strides = [1, 1, 1]} : vector<2x8x128xf32> to vector<2x1x128xf32>
    %12 = vector.shape_cast %11 : vector<2x1x128xf32> to vector<2x128xf32>
    %cst_10 = arith.constant dense<0.000000e+00> : vector<2x128xf32>
    %13 = tpu.matmul %9, %8, %cst_10 {dimension_numbers = #tpu.dot_dimension_numbers<[1], [0], [0], [1], [0, 0, 1, 1], [], []>} : vector<2x32xf32>, vector<32x128xf32>, vector<2x128xf32> -> vector<2x128xf32>
    %14 = arith.addf %12, %13 : vector<2x128xf32>
    %cst_11 = arith.constant 0.000000e+00 : f32
    %15 = vector.broadcast %cst_11 : f32 to vector<2x128xf32>
    %16 = arith.subf %15, %14 : vector<2x128xf32>
    %17 = math.exp %16 : vector<2x128xf32>
    %cst_12 = arith.constant 1.000000e+00 : f32
    %18 = vector.broadcast %cst_12 : f32 to vector<2x128xf32>
    %19 = arith.addf %18, %17 : vector<2x128xf32>
    %20 = tpu.reciprocal %19 {approx = true} : vector<2x128xf32> -> vector<2x128xf32>
    %21 = math.tanh %14 : vector<2x128xf32>
    %22 = vector.extract_strided_slice %20 {offsets = [0, 0], sizes = [2, 32], strides = [1, 1]} : vector<2x128xf32> to vector<2x32xf32>
    %23 = vector.extract_strided_slice %20 {offsets = [0, 32], sizes = [2, 32], strides = [1, 1]} : vector<2x128xf32> to vector<2x32xf32>
    %24 = vector.extract_strided_slice %21 {offsets = [0, 64], sizes = [2, 32], strides = [1, 1]} : vector<2x128xf32> to vector<2x32xf32>
    %25 = vector.extract_strided_slice %20 {offsets = [0, 96], sizes = [2, 32], strides = [1, 1]} : vector<2x128xf32> to vector<2x32xf32>
    %26 = arith.mulf %23, %10 : vector<2x32xf32>
    %27 = arith.mulf %22, %24 : vector<2x32xf32>
    %28 = arith.addf %26, %27 : vector<2x32xf32>
    %29 = math.tanh %28 : vector<2x32xf32>
    %30 = arith.mulf %25, %29 : vector<2x32xf32>
    %31 = vector.extract_strided_slice %7 {offsets = [0, 1, 0], sizes = [2, 1, 128], strides = [1, 1, 1]} : vector<2x8x128xf32> to vector<2x1x128xf32>
    %32 = vector.shape_cast %31 : vector<2x1x128xf32> to vector<2x128xf32>
    %cst_13 = arith.constant dense<0.000000e+00> : vector<2x128xf32>
    %33 = tpu.matmul %30, %8, %cst_13 {dimension_numbers = #tpu.dot_dimension_numbers<[1], [0], [0], [1], [0, 0, 1, 1], [], []>} : vector<2x32xf32>, vector<32x128xf32>, vector<2x128xf32> -> vector<2x128xf32>
    %34 = arith.addf %32, %33 : vector<2x128xf32>
    %cst_14 = arith.constant 0.000000e+00 : f32
    %35 = vector.broadcast %cst_14 : f32 to vector<2x128xf32>
    %36 = arith.subf %35, %34 : vector<2x128xf32>
    %37 = math.exp %36 : vector<2x128xf32>
    %cst_15 = arith.constant 1.000000e+00 : f32
    %38 = vector.broadcast %cst_15 : f32 to vector<2x128xf32>
    %39 = arith.addf %38, %37 : vector<2x128xf32>
    %40 = tpu.reciprocal %39 {approx = true} : vector<2x128xf32> -> vector<2x128xf32>
    %41 = math.tanh %34 : vector<2x128xf32>
    %42 = vector.extract_strided_slice %40 {offsets = [0, 0], sizes = [2, 32], strides = [1, 1]} : vector<2x128xf32> to vector<2x32xf32>
    %43 = vector.extract_strided_slice %40 {offsets = [0, 32], sizes = [2, 32], strides = [1, 1]} : vector<2x128xf32> to vector<2x32xf32>
    %44 = vector.extract_strided_slice %41 {offsets = [0, 64], sizes = [2, 32], strides = [1, 1]} : vector<2x128xf32> to vector<2x32xf32>
    %45 = vector.extract_strided_slice %40 {offsets = [0, 96], sizes = [2, 32], strides = [1, 1]} : vector<2x128xf32> to vector<2x32xf32>
    %46 = arith.mulf %43, %28 : vector<2x32xf32>
    %47 = arith.mulf %42, %44 : vector<2x32xf32>
    %48 = arith.addf %46, %47 : vector<2x32xf32>
    %49 = math.tanh %48 : vector<2x32xf32>
    %50 = arith.mulf %45, %49 : vector<2x32xf32>
    %51 = vector.extract_strided_slice %7 {offsets = [0, 2, 0], sizes = [2, 1, 128], strides = [1, 1, 1]} : vector<2x8x128xf32> to vector<2x1x128xf32>
    %52 = vector.shape_cast %51 : vector<2x1x128xf32> to vector<2x128xf32>
    %cst_16 = arith.constant dense<0.000000e+00> : vector<2x128xf32>
    %53 = tpu.matmul %50, %8, %cst_16 {dimension_numbers = #tpu.dot_dimension_numbers<[1], [0], [0], [1], [0, 0, 1, 1], [], []>} : vector<2x32xf32>, vector<32x128xf32>, vector<2x128xf32> -> vector<2x128xf32>
    %54 = arith.addf %52, %53 : vector<2x128xf32>
    %cst_17 = arith.constant 0.000000e+00 : f32
    %55 = vector.broadcast %cst_17 : f32 to vector<2x128xf32>
    %56 = arith.subf %55, %54 : vector<2x128xf32>
    %57 = math.exp %56 : vector<2x128xf32>
    %cst_18 = arith.constant 1.000000e+00 : f32
    %58 = vector.broadcast %cst_18 : f32 to vector<2x128xf32>
    %59 = arith.addf %58, %57 : vector<2x128xf32>
    %60 = tpu.reciprocal %59 {approx = true} : vector<2x128xf32> -> vector<2x128xf32>
    %61 = math.tanh %54 : vector<2x128xf32>
    %62 = vector.extract_strided_slice %60 {offsets = [0, 0], sizes = [2, 32], strides = [1, 1]} : vector<2x128xf32> to vector<2x32xf32>
    %63 = vector.extract_strided_slice %60 {offsets = [0, 32], sizes = [2, 32], strides = [1, 1]} : vector<2x128xf32> to vector<2x32xf32>
    %64 = vector.extract_strided_slice %61 {offsets = [0, 64], sizes = [2, 32], strides = [1, 1]} : vector<2x128xf32> to vector<2x32xf32>
    %65 = vector.extract_strided_slice %60 {offsets = [0, 96], sizes = [2, 32], strides = [1, 1]} : vector<2x128xf32> to vector<2x32xf32>
    %66 = arith.mulf %63, %48 : vector<2x32xf32>
    %67 = arith.mulf %62, %64 : vector<2x32xf32>
    %68 = arith.addf %66, %67 : vector<2x32xf32>
    %69 = math.tanh %68 : vector<2x32xf32>
    %70 = arith.mulf %65, %69 : vector<2x32xf32>
    %71 = vector.extract_strided_slice %7 {offsets = [0, 3, 0], sizes = [2, 1, 128], strides = [1, 1, 1]} : vector<2x8x128xf32> to vector<2x1x128xf32>
    %72 = vector.shape_cast %71 : vector<2x1x128xf32> to vector<2x128xf32>
    %cst_19 = arith.constant dense<0.000000e+00> : vector<2x128xf32>
    %73 = tpu.matmul %70, %8, %cst_19 {dimension_numbers = #tpu.dot_dimension_numbers<[1], [0], [0], [1], [0, 0, 1, 1], [], []>} : vector<2x32xf32>, vector<32x128xf32>, vector<2x128xf32> -> vector<2x128xf32>
    %74 = arith.addf %72, %73 : vector<2x128xf32>
    %cst_20 = arith.constant 0.000000e+00 : f32
    %75 = vector.broadcast %cst_20 : f32 to vector<2x128xf32>
    %76 = arith.subf %75, %74 : vector<2x128xf32>
    %77 = math.exp %76 : vector<2x128xf32>
    %cst_21 = arith.constant 1.000000e+00 : f32
    %78 = vector.broadcast %cst_21 : f32 to vector<2x128xf32>
    %79 = arith.addf %78, %77 : vector<2x128xf32>
    %80 = tpu.reciprocal %79 {approx = true} : vector<2x128xf32> -> vector<2x128xf32>
    %81 = math.tanh %74 : vector<2x128xf32>
    %82 = vector.extract_strided_slice %80 {offsets = [0, 0], sizes = [2, 32], strides = [1, 1]} : vector<2x128xf32> to vector<2x32xf32>
    %83 = vector.extract_strided_slice %80 {offsets = [0, 32], sizes = [2, 32], strides = [1, 1]} : vector<2x128xf32> to vector<2x32xf32>
    %84 = vector.extract_strided_slice %81 {offsets = [0, 64], sizes = [2, 32], strides = [1, 1]} : vector<2x128xf32> to vector<2x32xf32>
    %85 = vector.extract_strided_slice %80 {offsets = [0, 96], sizes = [2, 32], strides = [1, 1]} : vector<2x128xf32> to vector<2x32xf32>
    %86 = arith.mulf %83, %68 : vector<2x32xf32>
    %87 = arith.mulf %82, %84 : vector<2x32xf32>
    %88 = arith.addf %86, %87 : vector<2x32xf32>
    %89 = math.tanh %88 : vector<2x32xf32>
    %90 = arith.mulf %85, %89 : vector<2x32xf32>
    %91 = vector.extract_strided_slice %7 {offsets = [0, 4, 0], sizes = [2, 1, 128], strides = [1, 1, 1]} : vector<2x8x128xf32> to vector<2x1x128xf32>
    %92 = vector.shape_cast %91 : vector<2x1x128xf32> to vector<2x128xf32>
    %cst_22 = arith.constant dense<0.000000e+00> : vector<2x128xf32>
    %93 = tpu.matmul %90, %8, %cst_22 {dimension_numbers = #tpu.dot_dimension_numbers<[1], [0], [0], [1], [0, 0, 1, 1], [], []>} : vector<2x32xf32>, vector<32x128xf32>, vector<2x128xf32> -> vector<2x128xf32>
    %94 = arith.addf %92, %93 : vector<2x128xf32>
    %cst_23 = arith.constant 0.000000e+00 : f32
    %95 = vector.broadcast %cst_23 : f32 to vector<2x128xf32>
    %96 = arith.subf %95, %94 : vector<2x128xf32>
    %97 = math.exp %96 : vector<2x128xf32>
    %cst_24 = arith.constant 1.000000e+00 : f32
    %98 = vector.broadcast %cst_24 : f32 to vector<2x128xf32>
    %99 = arith.addf %98, %97 : vector<2x128xf32>
    %100 = tpu.reciprocal %99 {approx = true} : vector<2x128xf32> -> vector<2x128xf32>
    %101 = math.tanh %94 : vector<2x128xf32>
    %102 = vector.extract_strided_slice %100 {offsets = [0, 0], sizes = [2, 32], strides = [1, 1]} : vector<2x128xf32> to vector<2x32xf32>
    %103 = vector.extract_strided_slice %100 {offsets = [0, 32], sizes = [2, 32], strides = [1, 1]} : vector<2x128xf32> to vector<2x32xf32>
    %104 = vector.extract_strided_slice %101 {offsets = [0, 64], sizes = [2, 32], strides = [1, 1]} : vector<2x128xf32> to vector<2x32xf32>
    %105 = vector.extract_strided_slice %100 {offsets = [0, 96], sizes = [2, 32], strides = [1, 1]} : vector<2x128xf32> to vector<2x32xf32>
    %106 = arith.mulf %103, %88 : vector<2x32xf32>
    %107 = arith.mulf %102, %104 : vector<2x32xf32>
    %108 = arith.addf %106, %107 : vector<2x32xf32>
    %109 = math.tanh %108 : vector<2x32xf32>
    %110 = arith.mulf %105, %109 : vector<2x32xf32>
    %111 = vector.extract_strided_slice %7 {offsets = [0, 5, 0], sizes = [2, 1, 128], strides = [1, 1, 1]} : vector<2x8x128xf32> to vector<2x1x128xf32>
    %112 = vector.shape_cast %111 : vector<2x1x128xf32> to vector<2x128xf32>
    %cst_25 = arith.constant dense<0.000000e+00> : vector<2x128xf32>
    %113 = tpu.matmul %110, %8, %cst_25 {dimension_numbers = #tpu.dot_dimension_numbers<[1], [0], [0], [1], [0, 0, 1, 1], [], []>} : vector<2x32xf32>, vector<32x128xf32>, vector<2x128xf32> -> vector<2x128xf32>
    %114 = arith.addf %112, %113 : vector<2x128xf32>
    %cst_26 = arith.constant 0.000000e+00 : f32
    %115 = vector.broadcast %cst_26 : f32 to vector<2x128xf32>
    %116 = arith.subf %115, %114 : vector<2x128xf32>
    %117 = math.exp %116 : vector<2x128xf32>
    %cst_27 = arith.constant 1.000000e+00 : f32
    %118 = vector.broadcast %cst_27 : f32 to vector<2x128xf32>
    %119 = arith.addf %118, %117 : vector<2x128xf32>
    %120 = tpu.reciprocal %119 {approx = true} : vector<2x128xf32> -> vector<2x128xf32>
    %121 = math.tanh %114 : vector<2x128xf32>
    %122 = vector.extract_strided_slice %120 {offsets = [0, 0], sizes = [2, 32], strides = [1, 1]} : vector<2x128xf32> to vector<2x32xf32>
    %123 = vector.extract_strided_slice %120 {offsets = [0, 32], sizes = [2, 32], strides = [1, 1]} : vector<2x128xf32> to vector<2x32xf32>
    %124 = vector.extract_strided_slice %121 {offsets = [0, 64], sizes = [2, 32], strides = [1, 1]} : vector<2x128xf32> to vector<2x32xf32>
    %125 = vector.extract_strided_slice %120 {offsets = [0, 96], sizes = [2, 32], strides = [1, 1]} : vector<2x128xf32> to vector<2x32xf32>
    %126 = arith.mulf %123, %108 : vector<2x32xf32>
    %127 = arith.mulf %122, %124 : vector<2x32xf32>
    %128 = arith.addf %126, %127 : vector<2x32xf32>
    %129 = math.tanh %128 : vector<2x32xf32>
    %130 = arith.mulf %125, %129 : vector<2x32xf32>
    %131 = vector.extract_strided_slice %7 {offsets = [0, 6, 0], sizes = [2, 1, 128], strides = [1, 1, 1]} : vector<2x8x128xf32> to vector<2x1x128xf32>
    %132 = vector.shape_cast %131 : vector<2x1x128xf32> to vector<2x128xf32>
    %cst_28 = arith.constant dense<0.000000e+00> : vector<2x128xf32>
    %133 = tpu.matmul %130, %8, %cst_28 {dimension_numbers = #tpu.dot_dimension_numbers<[1], [0], [0], [1], [0, 0, 1, 1], [], []>} : vector<2x32xf32>, vector<32x128xf32>, vector<2x128xf32> -> vector<2x128xf32>
    %134 = arith.addf %132, %133 : vector<2x128xf32>
    %cst_29 = arith.constant 0.000000e+00 : f32
    %135 = vector.broadcast %cst_29 : f32 to vector<2x128xf32>
    %136 = arith.subf %135, %134 : vector<2x128xf32>
    %137 = math.exp %136 : vector<2x128xf32>
    %cst_30 = arith.constant 1.000000e+00 : f32
    %138 = vector.broadcast %cst_30 : f32 to vector<2x128xf32>
    %139 = arith.addf %138, %137 : vector<2x128xf32>
    %140 = tpu.reciprocal %139 {approx = true} : vector<2x128xf32> -> vector<2x128xf32>
    %141 = math.tanh %134 : vector<2x128xf32>
    %142 = vector.extract_strided_slice %140 {offsets = [0, 0], sizes = [2, 32], strides = [1, 1]} : vector<2x128xf32> to vector<2x32xf32>
    %143 = vector.extract_strided_slice %140 {offsets = [0, 32], sizes = [2, 32], strides = [1, 1]} : vector<2x128xf32> to vector<2x32xf32>
    %144 = vector.extract_strided_slice %141 {offsets = [0, 64], sizes = [2, 32], strides = [1, 1]} : vector<2x128xf32> to vector<2x32xf32>
    %145 = vector.extract_strided_slice %140 {offsets = [0, 96], sizes = [2, 32], strides = [1, 1]} : vector<2x128xf32> to vector<2x32xf32>
    %146 = arith.mulf %143, %128 : vector<2x32xf32>
    %147 = arith.mulf %142, %144 : vector<2x32xf32>
    %148 = arith.addf %146, %147 : vector<2x32xf32>
    %149 = math.tanh %148 : vector<2x32xf32>
    %150 = arith.mulf %145, %149 : vector<2x32xf32>
    %151 = vector.extract_strided_slice %7 {offsets = [0, 7, 0], sizes = [2, 1, 128], strides = [1, 1, 1]} : vector<2x8x128xf32> to vector<2x1x128xf32>
    %152 = vector.shape_cast %151 : vector<2x1x128xf32> to vector<2x128xf32>
    %cst_31 = arith.constant dense<0.000000e+00> : vector<2x128xf32>
    %153 = tpu.matmul %150, %8, %cst_31 {dimension_numbers = #tpu.dot_dimension_numbers<[1], [0], [0], [1], [0, 0, 1, 1], [], []>} : vector<2x32xf32>, vector<32x128xf32>, vector<2x128xf32> -> vector<2x128xf32>
    %154 = arith.addf %152, %153 : vector<2x128xf32>
    %cst_32 = arith.constant 0.000000e+00 : f32
    %155 = vector.broadcast %cst_32 : f32 to vector<2x128xf32>
    %156 = arith.subf %155, %154 : vector<2x128xf32>
    %157 = math.exp %156 : vector<2x128xf32>
    %cst_33 = arith.constant 1.000000e+00 : f32
    %158 = vector.broadcast %cst_33 : f32 to vector<2x128xf32>
    %159 = arith.addf %158, %157 : vector<2x128xf32>
    %160 = tpu.reciprocal %159 {approx = true} : vector<2x128xf32> -> vector<2x128xf32>
    %161 = math.tanh %154 : vector<2x128xf32>
    %162 = vector.extract_strided_slice %160 {offsets = [0, 0], sizes = [2, 32], strides = [1, 1]} : vector<2x128xf32> to vector<2x32xf32>
    %163 = vector.extract_strided_slice %160 {offsets = [0, 32], sizes = [2, 32], strides = [1, 1]} : vector<2x128xf32> to vector<2x32xf32>
    %164 = vector.extract_strided_slice %161 {offsets = [0, 64], sizes = [2, 32], strides = [1, 1]} : vector<2x128xf32> to vector<2x32xf32>
    %165 = vector.extract_strided_slice %160 {offsets = [0, 96], sizes = [2, 32], strides = [1, 1]} : vector<2x128xf32> to vector<2x32xf32>
    %166 = arith.mulf %163, %148 : vector<2x32xf32>
    %167 = arith.mulf %162, %164 : vector<2x32xf32>
    %168 = arith.addf %166, %167 : vector<2x32xf32>
    %169 = math.tanh %168 : vector<2x32xf32>
    %170 = arith.mulf %165, %169 : vector<2x32xf32>
    %171 = tpu.concatenate %30, %50, %70, %90, %110, %130, %150, %170 in 0 : vector<2x32xf32>, vector<2x32xf32>, vector<2x32xf32>, vector<2x32xf32>, vector<2x32xf32>, vector<2x32xf32>, vector<2x32xf32>, vector<2x32xf32> -> vector<16x32xf32>
    %172 = tpu.iota {dimensions = array<i32: 0>} : vector<16x1xi32>
    %c2_i32 = arith.constant 2 : i32
    %173 = vector.broadcast %c2_i32 : i32 to vector<16x1xi32>
    %174 = arith.cmpi sge, %172, %173 : vector<16x1xi32>
    %c2_i32_34 = arith.constant 2 : i32
    %175 = tpu.dynamic_rotate %171 by %c2_i32_34 dim 0 : vector<16x32xf32>, i32 -> vector<16x32xf32>
    %cst_35 = arith.constant 0.000000e+00 : f32
    %176 = vector.shape_cast %174 : vector<16x1xi1> to vector<16x1xi1>
    %177 = vector.broadcast %176 : vector<16x1xi1> to vector<16x32xi1>
    %178 = vector.broadcast %cst_35 : f32 to vector<16x32xf32>
    %179 = arith.select %177, %175, %178 : vector<16x32xi1>, vector<16x32xf32>
    %c0_36 = arith.constant 0 : index
    %c0_37 = arith.constant 0 : index
    %180 = vector.load %arg4[%c0_36, %c0_37] : memref<32x16xf32, #tpu.memory_space<vmem>>, vector<32x16xf32>
    %cst_38 = arith.constant dense<0.000000e+00> : vector<16x16xf32>
    %181 = tpu.matmul %179, %180, %cst_38 {dimension_numbers = #tpu.dot_dimension_numbers<[1], [0], [0], [1], [0, 0, 1, 1], [], []>} : vector<16x32xf32>, vector<32x16xf32>, vector<16x16xf32> -> vector<16x16xf32>
    %c0_39 = arith.constant 0 : index
    %c0_40 = arith.constant 0 : index
    %182 = vector.load %arg5[%c0_39, %c0_40] : memref<32x16xf32, #tpu.memory_space<vmem>>, vector<32x16xf32>
    %cst_41 = arith.constant dense<0.000000e+00> : vector<16x16xf32>
    %183 = tpu.matmul %171, %182, %cst_41 {dimension_numbers = #tpu.dot_dimension_numbers<[1], [0], [0], [1], [0, 0, 1, 1], [], []>} : vector<16x32xf32>, vector<32x16xf32>, vector<16x16xf32> -> vector<16x16xf32>
    %184 = arith.addf %181, %183 : vector<16x16xf32>
    %c0_42 = arith.constant 0 : index
    %c0_43 = arith.constant 0 : index
    %185 = vector.load %arg6[%c0_42, %c0_43] : memref<1x16xf32, #tpu.memory_space<vmem>>, vector<1x16xf32>
    %186 = vector.broadcast %185 : vector<1x16xf32> to vector<16x16xf32>
    %187 = arith.addf %184, %186 : vector<16x16xf32>
    %cst_44 = arith.constant 0.000000e+00 : f32
    %188 = vector.broadcast %cst_44 : f32 to vector<16x16xf32>
    %189 = arith.maximumf %187, %188 : vector<16x16xf32>
    %c0_45 = arith.constant 0 : index
    %c0_46 = arith.constant 0 : index
    %190 = vector.load %arg7[%c0_45, %c0_46] : memref<32x16xf32, #tpu.memory_space<vmem>>, vector<32x16xf32>
    %cst_47 = arith.constant dense<0.000000e+00> : vector<16x16xf32>
    %191 = tpu.matmul %171, %190, %cst_47 {dimension_numbers = #tpu.dot_dimension_numbers<[1], [0], [0], [1], [0, 0, 1, 1], [], []>} : vector<16x32xf32>, vector<32x16xf32>, vector<16x16xf32> -> vector<16x16xf32>
    %c0_48 = arith.constant 0 : index
    %c0_49 = arith.constant 0 : index
    %192 = vector.load %arg8[%c0_48, %c0_49] : memref<1x16xf32, #tpu.memory_space<vmem>>, vector<1x16xf32>
    %193 = vector.broadcast %192 : vector<1x16xf32> to vector<16x16xf32>
    %194 = arith.addf %191, %193 : vector<16x16xf32>
    %c2_i32_50 = arith.constant 2 : i32
    %195 = tpu.dynamic_rotate %189 by %c2_i32_50 dim 0 : vector<16x16xf32>, i32 -> vector<16x16xf32>
    %cst_51 = arith.constant 0.000000e+00 : f32
    %196 = vector.shape_cast %174 : vector<16x1xi1> to vector<16x1xi1>
    %197 = vector.broadcast %196 : vector<16x1xi1> to vector<16x16xi1>
    %198 = vector.broadcast %cst_51 : f32 to vector<16x16xf32>
    %199 = arith.select %197, %195, %198 : vector<16x16xi1>, vector<16x16xf32>
    %c0_52 = arith.constant 0 : index
    %c0_53 = arith.constant 0 : index
    %200 = vector.load %arg9[%c0_52, %c0_53] : memref<16x16xf32, #tpu.memory_space<vmem>>, vector<16x16xf32>
    %cst_54 = arith.constant dense<0.000000e+00> : vector<16x16xf32>
    %201 = tpu.matmul %199, %200, %cst_54 {dimension_numbers = #tpu.dot_dimension_numbers<[1], [0], [0], [1], [0, 0, 1, 1], [], []>} : vector<16x16xf32>, vector<16x16xf32>, vector<16x16xf32> -> vector<16x16xf32>
    %c0_55 = arith.constant 0 : index
    %c0_56 = arith.constant 0 : index
    %202 = vector.load %arg10[%c0_55, %c0_56] : memref<16x16xf32, #tpu.memory_space<vmem>>, vector<16x16xf32>
    %cst_57 = arith.constant dense<0.000000e+00> : vector<16x16xf32>
    %203 = tpu.matmul %189, %202, %cst_57 {dimension_numbers = #tpu.dot_dimension_numbers<[1], [0], [0], [1], [0, 0, 1, 1], [], []>} : vector<16x16xf32>, vector<16x16xf32>, vector<16x16xf32> -> vector<16x16xf32>
    %204 = arith.addf %201, %203 : vector<16x16xf32>
    %c0_58 = arith.constant 0 : index
    %c0_59 = arith.constant 0 : index
    %205 = vector.load %arg11[%c0_58, %c0_59] : memref<1x16xf32, #tpu.memory_space<vmem>>, vector<1x16xf32>
    %206 = vector.broadcast %205 : vector<1x16xf32> to vector<16x16xf32>
    %207 = arith.addf %204, %206 : vector<16x16xf32>
    %cst_60 = arith.constant 0.000000e+00 : f32
    %208 = vector.broadcast %cst_60 : f32 to vector<16x16xf32>
    %209 = arith.maximumf %207, %208 : vector<16x16xf32>
    %210 = arith.addf %209, %194 : vector<16x16xf32>
    %cst_61 = arith.constant 0.000000e+00 : f32
    %211 = vector.broadcast %cst_61 : f32 to vector<16x16xf32>
    %212 = arith.maximumf %210, %211 : vector<16x16xf32>
    %c0_62 = arith.constant 0 : index
    %c0_63 = arith.constant 0 : index
    %213 = vector.load %arg12[%c0_62, %c0_63] : memref<1x16xf32, #tpu.memory_space<vmem>>, vector<1x16xf32>
    %214 = vector.broadcast %213 : vector<1x16xf32> to vector<16x16xf32>
    %215 = arith.mulf %212, %214 : vector<16x16xf32>
    %cst_64 = arith.constant dense<0.000000e+00> : vector<16xf32>
    %216 = vector.multi_reduction <add>, %215, %cst_64 [1] : vector<16x16xf32> to vector<16xf32>
    %217 = vector.shape_cast %216 : vector<16xf32> to vector<16x1xf32>
    %c0_65 = arith.constant 0 : index
    %c0_66 = arith.constant 0 : index
    %218 = vector.load %arg13[%c0_65, %c0_66] : memref<1x1xf32, #tpu.memory_space<vmem>>, vector<1x1xf32>
    %219 = vector.broadcast %218 : vector<1x1xf32> to vector<16x1xf32>
    %220 = arith.addf %217, %219 : vector<16x1xf32>
    %cst_67 = arith.constant 0.000000e+00 : f32
    %221 = vector.broadcast %cst_67 : f32 to vector<16x1xf32>
    %222 = arith.maximumf %220, %221 : vector<16x1xf32>
    %c0_68 = arith.constant 0 : index
    %c0_69 = arith.constant 0 : index
    %223 = vector.load %arg14[%c0_68, %c0_69] : memref<16x1xf32, #tpu.memory_space<vmem>>, vector<16x1xf32>
    tpu.vector_store %arg14[%c0_68, %c0_69], %222 {strides = array<i32>} : memref<16x1xf32, #tpu.memory_space<vmem>>, vector<16x1xf32>,
    return
  }
}

</mosaic_0001>

<llo_original>
// kernel: generator_forward.1
$region0: #{generator_forward.1}
  #allocation0 [shape = 'u32[]', space=smem, size = 0x4, offset = 0x4, fixed_abs, tag = 'smem constant byte address 0x4 - core index']
  #allocation1 [shape = 'u32[144,128]{1,0:T(1,128)}', space=vmem, size = 0x12000, scoped, tag = 'internal scratch']
  #allocation2 [shape = 'f32[1,1]{1,0:T(1,128)S(1)}', space=vmem, size = 0x200, scoped, tag = 'scoped memory for generator_forward.1']
  %s0 = inlined_call_operand.vmem [shape: f32[2,8,32], index: 0, kind: input, shape index: {}]
  %s1 = inlined_call_operand.vmem [shape: f32[32,128], index: 1, kind: input, shape index: {}]
  %s2 = inlined_call_operand.vmem [shape: f32[32,128], index: 2, kind: input, shape index: {}]
  %s3 = inlined_call_operand.vmem [shape: f32[1,128], index: 3, kind: input, shape index: {}]
  %s4 = inlined_call_operand.vmem [shape: f32[32,16], index: 4, kind: input, shape index: {}]
  %s5 = inlined_call_operand.vmem [shape: f32[32,16], index: 5, kind: input, shape index: {}]
  %s6 = inlined_call_operand.vmem [shape: f32[1,16], index: 6, kind: input, shape index: {}]
  %s7 = inlined_call_operand.vmem [shape: f32[32,16], index: 7, kind: input, shape index: {}]
  %s8 = inlined_call_operand.vmem [shape: f32[1,16], index: 8, kind: input, shape index: {}]
  %s9 = inlined_call_operand.vmem [shape: f32[16,16], index: 9, kind: input, shape index: {}]
  %s10 = inlined_call_operand.vmem [shape: f32[16,16], index: 10, kind: input, shape index: {}]
  %s11 = inlined_call_operand.vmem [shape: f32[1,16], index: 11, kind: input, shape index: {}]
  %s12 = inlined_call_operand.vmem [shape: f32[1,16], index: 12, kind: input, shape index: {}]
  %s13 = inlined_call_operand.<no memory space> [shape: f32[1,1], index: 13, kind: input, shape index: {}]
  %s14 = inlined_call_operand.vmem [shape: f32[16,1], index: 14, kind: output, shape index: {}]
  %s15 = sld [smem:[#allocation0]]
  $region66: #{generator_forward.1} parent=0
    _
  %s17 = ssub.s32 1, %s15
  %s18 = scalar_select 0, %s17, %s15
  %v19 = vstv %s13
  %20 = vst [vmem:[#allocation2] sm:$0x1] %v19
  // Predicated region
  $region2: #{generator_forward.1} parent=0 // pred_check
    _
  $region3: #{generator_forward.1} parent=0 // pred_check_branch
    %22 = sbr.rel (0) target = $region5
  $region4: #{generator_forward.1} parent=0 // pred_region
    _
  $region5: #{generator_forward.1} parent=0 // pred_fallthru
    _
  // Predicated region
  $region6: #{generator_forward.1} parent=0 // pred_check
    _
  $region7: #{generator_forward.1} parent=0 // pred_check_branch
    %24 = sbr.rel (0) target = $region9
  $region8: #{generator_forward.1} parent=0 // pred_region
    _
  $region9: #{generator_forward.1} parent=0 // pred_fallthru
    _
  // Predicated region
  $region10: #{generator_forward.1} parent=0 // pred_check
    _
  $region11: #{generator_forward.1} parent=0 // pred_check_branch
    %26 = sbr.rel (0) target = $region13
  $region12: #{generator_forward.1} parent=0 // pred_region
    _
  $region13: #{generator_forward.1} parent=0 // pred_fallthru
    _
  // Predicated region
  $region14: #{generator_forward.1} parent=0 // pred_check
    _
  $region15: #{generator_forward.1} parent=0 // pred_check_branch
    %28 = sbr.rel (0) target = $region17
  $region16: #{generator_forward.1} parent=0 // pred_region
    _
  $region17: #{generator_forward.1} parent=0 // pred_fallthru
    _
  // Predicated region
  $region18: #{generator_forward.1} parent=0 // pred_check
    _
  $region19: #{generator_forward.1} parent=0 // pred_check_branch
    %30 = sbr.rel (0) target = $region21
  $region20: #{generator_forward.1} parent=0 // pred_region
    _
  $region21: #{generator_forward.1} parent=0 // pred_fallthru
    _
  // Predicated region
  $region22: #{generator_forward.1} parent=0 // pred_check
    _
  $region23: #{generator_forward.1} parent=0 // pred_check_branch
    %32 = sbr.rel (0) target = $region25
  $region24: #{generator_forward.1} parent=0 // pred_region
    _
  $region25: #{generator_forward.1} parent=0 // pred_fallthru
    _
  // Predicated region
  $region26: #{generator_forward.1} parent=0 // pred_check
    _
  $region27: #{generator_forward.1} parent=0 // pred_check_branch
    %34 = sbr.rel (0) target = $region29
  $region28: #{generator_forward.1} parent=0 // pred_region
    _
  $region29: #{generator_forward.1} parent=0 // pred_fallthru
    _
  // Predicated region
  $region30: #{generator_forward.1} parent=0 // pred_check
    _
  $region31: #{generator_forward.1} parent=0 // pred_check_branch
    %36 = sbr.rel (0) target = $region33
  $region32: #{generator_forward.1} parent=0 // pred_region
    _
  $region33: #{generator_forward.1} parent=0 // pred_fallthru
    _
  // Predicated region
  $region34: #{generator_forward.1} parent=0 // pred_check
    _
  $region35: #{generator_forward.1} parent=0 // pred_check_branch
    %38 = sbr.rel (0) target = $region37
  $region36: #{generator_forward.1} parent=0 // pred_region
    _
  $region37: #{generator_forward.1} parent=0 // pred_fallthru
    _
  // Predicated region
  $region38: #{generator_forward.1} parent=0 // pred_check
    _
  $region39: #{generator_forward.1} parent=0 // pred_check_branch
    %40 = sbr.rel (0) target = $region41
  $region40: #{generator_forward.1} parent=0 // pred_region
    _
  $region41: #{generator_forward.1} parent=0 // pred_fallthru
    _
  // Predicated region
  $region42: #{generator_forward.1} parent=0 // pred_check
    _
  $region43: #{generator_forward.1} parent=0 // pred_check_branch
    %42 = sbr.rel (0) target = $region45
  $region44: #{generator_forward.1} parent=0 // pred_region
    _
  $region45: #{generator_forward.1} parent=0 // pred_fallthru
    _
  // Predicated region
  $region46: #{generator_forward.1} parent=0 // pred_check
    _
  $region47: #{generator_forward.1} parent=0 // pred_check_branch
    %44 = sbr.rel (0) target = $region49
  $region48: #{generator_forward.1} parent=0 // pred_region
    _
  $region49: #{generator_forward.1} parent=0 // pred_fallthru
    _
  // Predicated region
  $region50: #{generator_forward.1} parent=0 // pred_check
    _
  $region51: #{generator_forward.1} parent=0 // pred_check_branch
    %46 = sbr.rel (0) target = $region53
  $region52: #{generator_forward.1} parent=0 // pred_region
    _
  $region53: #{generator_forward.1} parent=0 // pred_fallthru
    _
  // Predicated region
  $region54: #{generator_forward.1} parent=0 // pred_check
    _
  $region55: #{generator_forward.1} parent=0 // pred_check_branch
    %48 = sbr.rel (0) target = $region57
  $region56: #{generator_forward.1} parent=0 // pred_region
    _
  $region57: #{generator_forward.1} parent=0 // pred_fallthru
    _
  %v49 = vld [vmem:[%s0] sm:$0xff]
  %v50 = vld [vmem:[%s0 + $0x8] sm:$0xff]
  %v51 = vld [vmem:[%s1] sm:$0xff]
  %v52 = vld [vmem:[%s1 + $0x8] sm:$0xff]
  %v53 = vld [vmem:[%s1 + $0x10] sm:$0xff]
  %v54 = vld [vmem:[%s1 + $0x18] sm:$0xff]
  %v55 = vld [vmem:[%s3] sm:$0x1]
  %v57 = vlaneseq
  %v58 = vshrl.u32 %v57, 7
  %v59 = vsub.s32 0, %v58
  %v60 = vrot.slane %v55, %v59
  %vm62 = vcmask 261120
  %v64 = vsel %vm62, %v49, 0
  %v67 = vsel %vm62, %v50, 0
  %69 = vmatprep.subr.mxu0 0.0
  %70 = vmatpush1.msra.mxu0 0.0
  %71 = vmatprep.subr.mxu0 0.0
  %72 = vmatpush1.msra.mxu0 0.0
  %73 = vmatprep.subr.mxu0 0.0
  %74 = vmatpush1.msra.mxu0 0.0
  %75 = vmatprep.subr.mxu0 0.0
  %76 = vmatpush1.msra.mxu0 0.0
  %77 = vmatprep.subr.mxu0 0.0
  %78 = vmatpush1.msra.mxu0 0.0
  %79 = vmatprep.subr.mxu0 0.0
  %80 = vmatpush1.msra.mxu0 0.0
  %81 = vmatprep.subr.mxu0 0.0
  %82 = vmatpush1.msra.mxu0 0.0
  %83 = vmatprep.subr.mxu0 0.0
  %84 = vmatpush1.msra.mxu0 0.0
  %85 = vmatprep.subr.mxu0 0.0
  %86 = vmatpush1.msra.mxu0 0.0
  %87 = vmatprep.subr.mxu0 0.0
  %88 = vmatpush1.msra.mxu0 0.0
  %89 = vmatprep.subr.mxu0 0.0
  %90 = vmatpush1.msra.mxu0 0.0
  %91 = vmatprep.subr.mxu0 0.0
  %92 = vmatpush1.msra.mxu0 0.0
  %93 = vmatprep.subr.mxu0 0.0
  %94 = vmatpush1.msra.mxu0 %v54
  %95 = vmatprep.subr.mxu0 0.0
  %96 = vmatpush1.msra.mxu0 %v53
  %97 = vmatprep.subr.mxu0 0.0
  %98 = vmatpush1.msra.mxu0 %v52
  %99 = vmatprep.subr.mxu0 0.0
  %100 = vmatpush1.msra.mxu0 %v51
  %101 = vmatprep.subr.mxu0 0.0
  %102 = vmatpush2.msra.mxu0 0.0
  %103 = vmatprep.subr.mxu0 0.0
  %104 = vmatpush2.msra.mxu0 0.0
  %105 = vmatprep.subr.mxu0 0.0
  %106 = vmatpush2.msra.mxu0 0.0
  %107 = vmatprep.subr.mxu0 0.0
  %108 = vmatpush2.msra.mxu0 0.0
  %109 = vmatprep.subr.mxu0 0.0
  %110 = vmatpush2.msra.mxu0 0.0
  %111 = vmatprep.subr.mxu0 0.0
  %112 = vmatpush2.msra.mxu0 0.0
  %113 = vmatprep.subr.mxu0 0.0
  %114 = vmatpush2.msra.mxu0 0.0
  %115 = vmatprep.subr.mxu0 0.0
  %116 = vmatpush2.msra.mxu0 0.0
  %117 = vmatprep.subr.mxu0 0.0
  %118 = vmatpush2.msra.mxu0 0.0
  %119 = vmatprep.subr.mxu0 0.0
  %120 = vmatpush2.msra.mxu0 0.0
  %121 = vmatprep.subr.mxu0 0.0
  %122 = vmatpush2.msra.mxu0 0.0
  %123 = vmatprep.subr.mxu0 0.0
  %124 = vmatpush2.msra.mxu0 0.0
  %125 = vmatprep.subr.mxu0 0.0
  %126 = vmatpush2.msra.mxu0 0.0
  %127 = vmatprep.subr.mxu0 0.0
  %128 = vmatpush2.msra.mxu0 0.0
  %129 = vmatprep.subr.mxu0 0.0
  %130 = vmatpush2.msra.mxu0 0.0
  %131 = vmatprep.subr.mxu0 0.0
  %132 = vmatpush2.msra.mxu0 0.0
  %133 = vmatprep.mubr.f32.mxu0 0.0
  %134 = vmatmul.mubr.f32.gmra.mxu0 %v64
  %v135 = vpop.f32.mrf.mxu0
  %v136 = vadd.f32 %v60, %v135
  %v137 = vpop.f32.mrf.mxu0
  %138 = vmatprep.mubr.f32.mxu0 0.0
  %139 = vmatmul.mubr.f32.gmra.mxu0 %v67
  %v140 = vpop.f32.mrf.mxu0
  %v141 = vadd.f32 %v60, %v140
  %v142 = vpop.f32.mrf.mxu0
  %143 = vdwg.mxu0
  %v144 = vld [vmem:[%s2] sm:$0xff]
  %v145 = vld [vmem:[%s2 + $0x8] sm:$0xff]
  %v146 = vld [vmem:[%s2 + $0x10] sm:$0xff]
  %v147 = vld [vmem:[%s2 + $0x18] sm:$0xff]
  %v149 = vsel %vm62, 0.0, 0
  %151 = vmatprep.subr.mxu0 0.0
  %152 = vmatpush1.msra.mxu0 0.0
  %153 = vmatprep.subr.mxu0 0.0
  %154 = vmatpush1.msra.mxu0 0.0
  %155 = vmatprep.subr.mxu0 0.0
  %156 = vmatpush1.msra.mxu0 0.0
  %157 = vmatprep.subr.mxu0 0.0
  %158 = vmatpush1.msra.mxu0 0.0
  %159 = vmatprep.subr.mxu0 0.0
  %160 = vmatpush1.msra.mxu0 0.0
  %161 = vmatprep.subr.mxu0 0.0
  %162 = vmatpush1.msra.mxu0 0.0
  %163 = vmatprep.subr.mxu0 0.0
  %164 = vmatpush1.msra.mxu0 0.0
  %165 = vmatprep.subr.mxu0 0.0
  %166 = vmatpush1.msra.mxu0 0.0
  %167 = vmatprep.subr.mxu0 0.0
  %168 = vmatpush1.msra.mxu0 0.0
  %169 = vmatprep.subr.mxu0 0.0
  %170 = vmatpush1.msra.mxu0 0.0
  %171 = vmatprep.subr.mxu0 0.0
  %172 = vmatpush1.msra.mxu0 0.0
  %173 = vmatprep.subr.mxu0 0.0
  %174 = vmatpush1.msra.mxu0 0.0
  %175 = vmatprep.subr.mxu0 0.0
  %176 = vmatpush1.msra.mxu0 %v147
  %177 = vmatprep.subr.mxu0 0.0
  %178 = vmatpush1.msra.mxu0 %v146
  %179 = vmatprep.subr.mxu0 0.0
  %180 = vmatpush1.msra.mxu0 %v145
  %181 = vmatprep.subr.mxu0 0.0
  %182 = vmatpush1.msra.mxu0 %v144
  %183 = vmatprep.subr.mxu0 0.0
  %184 = vmatpush2.msra.mxu0 0.0
  %185 = vmatprep.subr.mxu0 0.0
  %186 = vmatpush2.msra.mxu0 0.0
  %187 = vmatprep.subr.mxu0 0.0
  %188 = vmatpush2.msra.mxu0 0.0
  %189 = vmatprep.subr.mxu0 0.0
  %190 = vmatpush2.msra.mxu0 0.0
  %191 = vmatprep.subr.mxu0 0.0
  %192 = vmatpush2.msra.mxu0 0.0
  %193 = vmatprep.subr.mxu0 0.0
  %194 = vmatpush2.msra.mxu0 0.0
  %195 = vmatprep.subr.mxu0 0.0
  %196 = vmatpush2.msra.mxu0 0.0
  %197 = vmatprep.subr.mxu0 0.0
  %198 = vmatpush2.msra.mxu0 0.0
  %199 = vmatprep.subr.mxu0 0.0
  %200 = vmatpush2.msra.mxu0 0.0
  %201 = vmatprep.subr.mxu0 0.0
  %202 = vmatpush2.msra.mxu0 0.0
  %203 = vmatprep.subr.mxu0 0.0
  %204 = vmatpush2.msra.mxu0 0.0
  %205 = vmatprep.subr.mxu0 0.0
  %206 = vmatpush2.msra.mxu0 0.0
  %207 = vmatprep.subr.mxu0 0.0
  %208 = vmatpush2.msra.mxu0 0.0
  %209 = vmatprep.subr.mxu0 0.0
  %210 = vmatpush2.msra.mxu0 0.0
  %211 = vmatprep.subr.mxu0 0.0
  %212 = vmatpush2.msra.mxu0 0.0
  %213 = vmatprep.subr.mxu0 0.0
  %214 = vmatpush2.msra.mxu0 0.0
  %215 = vmatprep.mubr.f32.mxu0 0.0
  %216 = vmatmul.mubr.f32.gmra.mxu0 %v149
  %v217 = vpop.f32.mrf.mxu0
  %v218 = vadd.f32 0.0, %v217
  %v219 = vpop.f32.mrf.mxu0
  %220 = vdwg.mxu0
  %v222 = vrot.slane %v218, 1
  %v225 = vadd.f32 %v136, %v218
  %v226 = vadd.f32 %v141, %v222
  %v227 = vsub.f32 0.0, %v225
  %v228 = vsub.f32 0.0, %v226
  %v229 = vmul.f32 %v227, 1.442695
  %v230 = vpow.pop %v229
  %v231 = vmul.f32 %v228, 1.442695
  %v232 = vpow.pop %v231
  %v233 = vadd.f32 %v230, 1.0
  %v234 = vadd.f32 %v232, 1.0
  %v235 = vrcp.pop %v233
  %v236 = vrcp.pop %v234
  %v237 = vtanh.pop %v225
  %v238 = vtanh.pop %v226
  %v239 = vmul.f32 %v235, 0.0
  %v240 = vmul.f32 %v236, 0.0
  %243 = vrot.lane.b32.xlu0 %v237, 64
  %v244 = vpop.permute.xlu0 %243
  %245 = vrot.lane.b32.xlu0 %v238, 64
  %v246 = vpop.permute.xlu0 %245
  %v249 = vmul.f32 %v235, %v244
  %v250 = vmul.f32 %v236, %v246
  %253 = vrot.lane.b32.xlu0 %v249, 32
  %v254 = vpop.permute.xlu0 %253
  %255 = vrot.lane.b32.xlu0 %v250, 32
  %v256 = vpop.permute.xlu0 %255
  %v259 = vadd.f32 %v239, %v254
  %v260 = vadd.f32 %v240, %v256
  %v261 = vtanh.pop %v259
  %v262 = vtanh.pop %v260
  %265 = vrot.lane.b32.xlu0 %v261, 64
  %v266 = vpop.permute.xlu0 %265
  %267 = vrot.lane.b32.xlu0 %v262, 64
  %v268 = vpop.permute.xlu0 %267
  %v271 = vmul.f32 %v235, %v266
  %v272 = vmul.f32 %v236, %v268
  %v275 = vrot.slane %v272, 7
  %vm276 = vcmask 1041409
  %v277 = vsel %vm276, %v275, %v271
  %278 = vrot.lane.b32.xlu0 %v277, 32
  %v279 = vpop.permute.xlu0 %278
  %v280 = vsel %vm62, %v279, 0
  %282 = vmatprep.subr.mxu0 0.0
  %283 = vmatpush1.msra.mxu0 0.0
  %284 = vmatprep.subr.mxu0 0.0
  %285 = vmatpush1.msra.mxu0 0.0
  %286 = vmatprep.subr.mxu0 0.0
  %287 = vmatpush1.msra.mxu0 0.0
  %288 = vmatprep.subr.mxu0 0.0
  %289 = vmatpush1.msra.mxu0 0.0
  %290 = vmatprep.subr.mxu0 0.0
  %291 = vmatpush1.msra.mxu0 0.0
  %292 = vmatprep.subr.mxu0 0.0
  %293 = vmatpush1.msra.mxu0 0.0
  %294 = vmatprep.subr.mxu0 0.0
  %295 = vmatpush1.msra.mxu0 0.0
  %296 = vmatprep.subr.mxu0 0.0
  %297 = vmatpush1.msra.mxu0 0.0
  %298 = vmatprep.subr.mxu0 0.0
  %299 = vmatpush1.msra.mxu0 0.0
  %300 = vmatprep.subr.mxu0 0.0
  %301 = vmatpush1.msra.mxu0 0.0
  %302 = vmatprep.subr.mxu0 0.0
  %303 = vmatpush1.msra.mxu0 0.0
  %304 = vmatprep.subr.mxu0 0.0
  %305 = vmatpush1.msra.mxu0 0.0
  %306 = vmatprep.subr.mxu0 0.0
  %307 = vmatpush1.msra.mxu0 %v147
  %308 = vmatprep.subr.mxu0 0.0
  %309 = vmatpush1.msra.mxu0 %v146
  %310 = vmatprep.subr.mxu0 0.0
  %311 = vmatpush1.msra.mxu0 %v145
  %312 = vmatprep.subr.mxu0 0.0
  %313 = vmatpush1.msra.mxu0 %v144
  %314 = vmatprep.subr.mxu0 0.0
  %315 = vmatpush2.msra.mxu0 0.0
  %316 = vmatprep.subr.mxu0 0.0
  %317 = vmatpush2.msra.mxu0 0.0
  %318 = vmatprep.subr.mxu0 0.0
  %319 = vmatpush2.msra.mxu0 0.0
  %320 = vmatprep.subr.mxu0 0.0
  %321 = vmatpush2.msra.mxu0 0.0
  %322 = vmatprep.subr.mxu0 0.0
  %323 = vmatpush2.msra.mxu0 0.0
  %324 = vmatprep.subr.mxu0 0.0
  %325 = vmatpush2.msra.mxu0 0.0
  %326 = vmatprep.subr.mxu0 0.0
  %327 = vmatpush2.msra.mxu0 0.0
  %328 = vmatprep.subr.mxu0 0.0
  %329 = vmatpush2.msra.mxu0 0.0
  %330 = vmatprep.subr.mxu0 0.0
  %331 = vmatpush2.msra.mxu0 0.0
  %332 = vmatprep.subr.mxu0 0.0
  %333 = vmatpush2.msra.mxu0 0.0
  %334 = vmatprep.subr.mxu0 0.0
  %335 = vmatpush2.msra.mxu0 0.0
  %336 = vmatprep.subr.mxu0 0.0
  %337 = vmatpush2.msra.mxu0 0.0
  %338 = vmatprep.subr.mxu0 0.0
  %339 = vmatpush2.msra.mxu0 0.0
  %340 = vmatprep.subr.mxu0 0.0
  %341 = vmatpush2.msra.mxu0 0.0
  %342 = vmatprep.subr.mxu0 0.0
  %343 = vmatpush2.msra.mxu0 0.0
  %344 = vmatprep.subr.mxu0 0.0
  %345 = vmatpush2.msra.mxu0 0.0
  %346 = vmatprep.mubr.f32.mxu0 0.0
  %347 = vmatmul.mubr.f32.gmra.mxu0 %v280
  %v348 = vpop.f32.mrf.mxu0
  %v349 = vadd.f32 0.0, %v348
  %v350 = vpop.f32.mrf.mxu0
  %351 = vdwg.mxu0
  %v353 = vrot.slane %v349, 7
  %v356 = vadd.f32 %v136, %v353
  %v357 = vadd.f32 %v141, %v349
  %v358 = vsub.f32 0.0, %v356
  %v359 = vsub.f32 0.0, %v357
  %v360 = vmul.f32 %v358, 1.442695
  %v361 = vpow.pop %v360
  %v362 = vmul.f32 %v359, 1.442695
  %v363 = vpow.pop %v362
  %v364 = vadd.f32 %v361, 1.0
  %v365 = vadd.f32 %v363, 1.0
  %v366 = vrcp.pop %v364
  %v367 = vrcp.pop %v365
  %v368 = vtanh.pop %v356
  %v369 = vtanh.pop %v357
  %v372 = vrot.slane %v259, 7
  %v373 = vrot.slane %v260, 7
  %v376 = vmul.f32 %v366, %v372
  %v377 = vmul.f32 %v367, %v373
  %380 = vrot.lane.b32.xlu0 %v368, 64
  %v381 = vpop.permute.xlu0 %380
  %382 = vrot.lane.b32.xlu0 %v369, 64
  %v383 = vpop.permute.xlu0 %382
  %v386 = vmul.f32 %v366, %v381
  %v387 = vmul.f32 %v367, %v383
  %390 = vrot.lane.b32.xlu0 %v386, 32
  %v391 = vpop.permute.xlu0 %390
  %392 = vrot.lane.b32.xlu0 %v387, 32
  %v393 = vpop.permute.xlu0 %392
  %v396 = vadd.f32 %v376, %v391
  %v397 = vadd.f32 %v377, %v393
  %v398 = vtanh.pop %v396
  %v399 = vtanh.pop %v397
  %402 = vrot.lane.b32.xlu0 %v398, 64
  %v403 = vpop.permute.xlu0 %402
  %404 = vrot.lane.b32.xlu0 %v399, 64
  %v405 = vpop.permute.xlu0 %404
  %v408 = vmul.f32 %v366, %v403
  %v409 = vmul.f32 %v367, %v405
  %v412 = vrot.slane %v408, 1
  %v413 = vsel %vm276, %v409, %v412
  %414 = vrot.lane.b32.xlu0 %v413, 32
  %v415 = vpop.permute.xlu0 %414
  %v416 = vsel %vm62, %v415, 0
  %418 = vmatprep.subr.mxu0 0.0
  %419 = vmatpush1.msra.mxu0 0.0
  %420 = vmatprep.subr.mxu0 0.0
  %421 = vmatpush1.msra.mxu0 0.0
  %422 = vmatprep.subr.mxu0 0.0
  %423 = vmatpush1.msra.mxu0 0.0
  %424 = vmatprep.subr.mxu0 0.0
  %425 = vmatpush1.msra.mxu0 0.0
  %426 = vmatprep.subr.mxu0 0.0
  %427 = vmatpush1.msra.mxu0 0.0
  %428 = vmatprep.subr.mxu0 0.0
  %429 = vmatpush1.msra.mxu0 0.0
  %430 = vmatprep.subr.mxu0 0.0
  %431 = vmatpush1.msra.mxu0 0.0
  %432 = vmatprep.subr.mxu0 0.0
  %433 = vmatpush1.msra.mxu0 0.0
  %434 = vmatprep.subr.mxu0 0.0
  %435 = vmatpush1.msra.mxu0 0.0
  %436 = vmatprep.subr.mxu0 0.0
  %437 = vmatpush1.msra.mxu0 0.0
  %438 = vmatprep.subr.mxu0 0.0
  %439 = vmatpush1.msra.mxu0 0.0
  %440 = vmatprep.subr.mxu0 0.0
  %441 = vmatpush1.msra.mxu0 0.0
  %442 = vmatprep.subr.mxu0 0.0
  %443 = vmatpush1.msra.mxu0 %v147
  %444 = vmatprep.subr.mxu0 0.0
  %445 = vmatpush1.msra.mxu0 %v146
  %446 = vmatprep.subr.mxu0 0.0
  %447 = vmatpush1.msra.mxu0 %v145
  %448 = vmatprep.subr.mxu0 0.0
  %449 = vmatpush1.msra.mxu0 %v144
  %450 = vmatprep.subr.mxu0 0.0
  %451 = vmatpush2.msra.mxu0 0.0
  %452 = vmatprep.subr.mxu0 0.0
  %453 = vmatpush2.msra.mxu0 0.0
  %454 = vmatprep.subr.mxu0 0.0
  %455 = vmatpush2.msra.mxu0 0.0
  %456 = vmatprep.subr.mxu0 0.0
  %457 = vmatpush2.msra.mxu0 0.0
  %458 = vmatprep.subr.mxu0 0.0
  %459 = vmatpush2.msra.mxu0 0.0
  %460 = vmatprep.subr.mxu0 0.0
  %461 = vmatpush2.msra.mxu0 0.0
  %462 = vmatprep.subr.mxu0 0.0
  %463 = vmatpush2.msra.mxu0 0.0
  %464 = vmatprep.subr.mxu0 0.0
  %465 = vmatpush2.msra.mxu0 0.0
  %466 = vmatprep.subr.mxu0 0.0
  %467 = vmatpush2.msra.mxu0 0.0
  %468 = vmatprep.subr.mxu0 0.0
  %469 = vmatpush2.msra.mxu0 0.0
  %470 = vmatprep.subr.mxu0 0.0
  %471 = vmatpush2.msra.mxu0 0.0
  %472 = vmatprep.subr.mxu0 0.0
  %473 = vmatpush2.msra.mxu0 0.0
  %474 = vmatprep.subr.mxu0 0.0
  %475 = vmatpush2.msra.mxu0 0.0
  %476 = vmatprep.subr.mxu0 0.0
  %477 = vmatpush2.msra.mxu0 0.0
  %478 = vmatprep.subr.mxu0 0.0
  %479 = vmatpush2.msra.mxu0 0.0
  %480 = vmatprep.subr.mxu0 0.0
  %481 = vmatpush2.msra.mxu0 0.0
  %482 = vmatprep.mubr.f32.mxu0 0.0
  %483 = vmatmul.mubr.f32.gmra.mxu0 %v416
  %v484 = vpop.f32.mrf.mxu0
  %v485 = vadd.f32 0.0, %v484
  %v486 = vpop.f32.mrf.mxu0
  %487 = vdwg.mxu0
  %v489 = vrot.slane %v485, 6
  %v490 = vrot.slane %v485, 7
  %v493 = vadd.f32 %v136, %v489
  %v494 = vadd.f32 %v141, %v490
  %v495 = vsub.f32 0.0, %v493
  %v496 = vsub.f32 0.0, %v494
  %v497 = vmul.f32 %v495, 1.442695
  %v498 = vpow.pop %v497
  %v499 = vmul.f32 %v496, 1.442695
  %v500 = vpow.pop %v499
  %v501 = vadd.f32 %v498, 1.0
  %v502 = vadd.f32 %v500, 1.0
  %v503 = vrcp.pop %v501
  %v504 = vrcp.pop %v502
  %v505 = vtanh.pop %v493
  %v506 = vtanh.pop %v494
  %v509 = vrot.slane %v396, 7
  %v510 = vrot.slane %v397, 7
  %v513 = vmul.f32 %v503, %v509
  %v514 = vmul.f32 %v504, %v510
  %517 = vrot.lane.b32.xlu0 %v505, 64
  %v518 = vpop.permute.xlu0 %517
  %519 = vrot.lane.b32.xlu0 %v506, 64
  %v520 = vpop.permute.xlu0 %519
  %v523 = vmul.f32 %v503, %v518
  %v524 = vmul.f32 %v504, %v520
  %527 = vrot.lane.b32.xlu0 %v523, 32
  %v528 = vpop.permute.xlu0 %527
  %529 = vrot.lane.b32.xlu0 %v524, 32
  %v530 = vpop.permute.xlu0 %529
  %v533 = vadd.f32 %v513, %v528
  %v534 = vadd.f32 %v514, %v530
  %v535 = vtanh.pop %v533
  %v536 = vtanh.pop %v534
  %539 = vrot.lane.b32.xlu0 %v535, 64
  %v540 = vpop.permute.xlu0 %539
  %541 = vrot.lane.b32.xlu0 %v536, 64
  %v542 = vpop.permute.xlu0 %541
  %v545 = vmul.f32 %v503, %v540
  %v546 = vmul.f32 %v504, %v542
  %v549 = vrot.slane %v545, 2
  %v550 = vrot.slane %v546, 1
  %v551 = vsel %vm276, %v550, %v549
  %552 = vrot.lane.b32.xlu0 %v551, 32
  %v553 = vpop.permute.xlu0 %552
  %v554 = vsel %vm62, %v553, 0
  %556 = vmatprep.subr.mxu0 0.0
  %557 = vmatpush1.msra.mxu0 0.0
  %558 = vmatprep.subr.mxu0 0.0
  %559 = vmatpush1.msra.mxu0 0.0
  %560 = vmatprep.subr.mxu0 0.0
  %561 = vmatpush1.msra.mxu0 0.0
  %562 = vmatprep.subr.mxu0 0.0
  %563 = vmatpush1.msra.mxu0 0.0
  %564 = vmatprep.subr.mxu0 0.0
  %565 = vmatpush1.msra.mxu0 0.0
  %566 = vmatprep.subr.mxu0 0.0
  %567 = vmatpush1.msra.mxu0 0.0
  %568 = vmatprep.subr.mxu0 0.0
  %569 = vmatpush1.msra.mxu0 0.0
  %570 = vmatprep.subr.mxu0 0.0
  %571 = vmatpush1.msra.mxu0 0.0
  %572 = vmatprep.subr.mxu0 0.0
  %573 = vmatpush1.msra.mxu0 0.0
  %574 = vmatprep.subr.mxu0 0.0
  %575 = vmatpush1.msra.mxu0 0.0
  %576 = vmatprep.subr.mxu0 0.0
  %577 = vmatpush1.msra.mxu0 0.0
  %578 = vmatprep.subr.mxu0 0.0
  %579 = vmatpush1.msra.mxu0 0.0
  %580 = vmatprep.subr.mxu0 0.0
  %581 = vmatpush1.msra.mxu0 %v147
  %582 = vmatprep.subr.mxu0 0.0
  %583 = vmatpush1.msra.mxu0 %v146
  %584 = vmatprep.subr.mxu0 0.0
  %585 = vmatpush1.msra.mxu0 %v145
  %586 = vmatprep.subr.mxu0 0.0
  %587 = vmatpush1.msra.mxu0 %v144
  %588 = vmatprep.subr.mxu0 0.0
  %589 = vmatpush2.msra.mxu0 0.0
  %590 = vmatprep.subr.mxu0 0.0
  %591 = vmatpush2.msra.mxu0 0.0
  %592 = vmatprep.subr.mxu0 0.0
  %593 = vmatpush2.msra.mxu0 0.0
  %594 = vmatprep.subr.mxu0 0.0
  %595 = vmatpush2.msra.mxu0 0.0
  %596 = vmatprep.subr.mxu0 0.0
  %597 = vmatpush2.msra.mxu0 0.0
  %598 = vmatprep.subr.mxu0 0.0
  %599 = vmatpush2.msra.mxu0 0.0
  %600 = vmatprep.subr.mxu0 0.0
  %601 = vmatpush2.msra.mxu0 0.0
  %602 = vmatprep.subr.mxu0 0.0
  %603 = vmatpush2.msra.mxu0 0.0
  %604 = vmatprep.subr.mxu0 0.0
  %605 = vmatpush2.msra.mxu0 0.0
  %606 = vmatprep.subr.mxu0 0.0
  %607 = vmatpush2.msra.mxu0 0.0
  %608 = vmatprep.subr.mxu0 0.0
  %609 = vmatpush2.msra.mxu0 0.0
  %610 = vmatprep.subr.mxu0 0.0
  %611 = vmatpush2.msra.mxu0 0.0
  %612 = vmatprep.subr.mxu0 0.0
  %613 = vmatpush2.msra.mxu0 0.0
  %614 = vmatprep.subr.mxu0 0.0
  %615 = vmatpush2.msra.mxu0 0.0
  %616 = vmatprep.subr.mxu0 0.0
  %617 = vmatpush2.msra.mxu0 0.0
  %618 = vmatprep.subr.mxu0 0.0
  %619 = vmatpush2.msra.mxu0 0.0
  %620 = vmatprep.mubr.f32.mxu0 0.0
  %621 = vmatmul.mubr.f32.gmra.mxu0 %v554
  %v622 = vpop.f32.mrf.mxu0
  %v623 = vadd.f32 0.0, %v622
  %v624 = vpop.f32.mrf.mxu0
  %625 = vdwg.mxu0
  %v627 = vrot.slane %v623, 5
  %v628 = vrot.slane %v623, 6
  %v631 = vadd.f32 %v136, %v627
  %v632 = vadd.f32 %v141, %v628
  %v633 = vsub.f32 0.0, %v631
  %v634 = vsub.f32 0.0, %v632
  %v635 = vmul.f32 %v633, 1.442695
  %v636 = vpow.pop %v635
  %v637 = vmul.f32 %v634, 1.442695
  %v638 = vpow.pop %v637
  %v639 = vadd.f32 %v636, 1.0
  %v640 = vadd.f32 %v638, 1.0
  %v641 = vrcp.pop %v639
  %v642 = vrcp.pop %v640
  %v643 = vtanh.pop %v631
  %v644 = vtanh.pop %v632
  %v647 = vrot.slane %v533, 7
  %v648 = vrot.slane %v534, 7
  %v651 = vmul.f32 %v641, %v647
  %v652 = vmul.f32 %v642, %v648
  %655 = vrot.lane.b32.xlu0 %v643, 64
  %v656 = vpop.permute.xlu0 %655
  %657 = vrot.lane.b32.xlu0 %v644, 64
  %v658 = vpop.permute.xlu0 %657
  %v661 = vmul.f32 %v641, %v656
  %v662 = vmul.f32 %v642, %v658
  %665 = vrot.lane.b32.xlu0 %v661, 32
  %v666 = vpop.permute.xlu0 %665
  %667 = vrot.lane.b32.xlu0 %v662, 32
  %v668 = vpop.permute.xlu0 %667
  %v671 = vadd.f32 %v651, %v666
  %v672 = vadd.f32 %v652, %v668
  %v673 = vtanh.pop %v671
  %v674 = vtanh.pop %v672
  %677 = vrot.lane.b32.xlu0 %v673, 64
  %v678 = vpop.permute.xlu0 %677
  %679 = vrot.lane.b32.xlu0 %v674, 64
  %v680 = vpop.permute.xlu0 %679
  %v683 = vmul.f32 %v641, %v678
  %v684 = vmul.f32 %v642, %v680
  %v687 = vrot.slane %v683, 3
  %v688 = vrot.slane %v684, 2
  %v689 = vsel %vm276, %v688, %v687
  %690 = vrot.lane.b32.xlu0 %v689, 32
  %v691 = vpop.permute.xlu0 %690
  %v692 = vsel %vm62, %v691, 0
  %694 = vmatprep.subr.mxu0 0.0
  %695 = vmatpush1.msra.mxu0 0.0
  %696 = vmatprep.subr.mxu0 0.0
  %697 = vmatpush1.msra.mxu0 0.0
  %698 = vmatprep.subr.mxu0 0.0
  %699 = vmatpush1.msra.mxu0 0.0
  %700 = vmatprep.subr.mxu0 0.0
  %701 = vmatpush1.msra.mxu0 0.0
  %702 = vmatprep.subr.mxu0 0.0
  %703 = vmatpush1.msra.mxu0 0.0
  %704 = vmatprep.subr.mxu0 0.0
  %705 = vmatpush1.msra.mxu0 0.0
  %706 = vmatprep.subr.mxu0 0.0
  %707 = vmatpush1.msra.mxu0 0.0
  %708 = vmatprep.subr.mxu0 0.0
  %709 = vmatpush1.msra.mxu0 0.0
  %710 = vmatprep.subr.mxu0 0.0
  %711 = vmatpush1.msra.mxu0 0.0
  %712 = vmatprep.subr.mxu0 0.0
  %713 = vmatpush1.msra.mxu0 0.0
  %714 = vmatprep.subr.mxu0 0.0
  %715 = vmatpush1.msra.mxu0 0.0
  %716 = vmatprep.subr.mxu0 0.0
  %717 = vmatpush1.msra.mxu0 0.0
  %718 = vmatprep.subr.mxu0 0.0
  %719 = vmatpush1.msra.mxu0 %v147
  %720 = vmatprep.subr.mxu0 0.0
  %721 = vmatpush1.msra.mxu0 %v146
  %722 = vmatprep.subr.mxu0 0.0
  %723 = vmatpush1.msra.mxu0 %v145
  %724 = vmatprep.subr.mxu0 0.0
  %725 = vmatpush1.msra.mxu0 %v144
  %726 = vmatprep.subr.mxu0 0.0
  %727 = vmatpush2.msra.mxu0 0.0
  %728 = vmatprep.subr.mxu0 0.0
  %729 = vmatpush2.msra.mxu0 0.0
  %730 = vmatprep.subr.mxu0 0.0
  %731 = vmatpush2.msra.mxu0 0.0
  %732 = vmatprep.subr.mxu0 0.0
  %733 = vmatpush2.msra.mxu0 0.0
  %734 = vmatprep.subr.mxu0 0.0
  %735 = vmatpush2.msra.mxu0 0.0
  %736 = vmatprep.subr.mxu0 0.0
  %737 = vmatpush2.msra.mxu0 0.0
  %738 = vmatprep.subr.mxu0 0.0
  %739 = vmatpush2.msra.mxu0 0.0
  %740 = vmatprep.subr.mxu0 0.0
  %741 = vmatpush2.msra.mxu0 0.0
  %742 = vmatprep.subr.mxu0 0.0
  %743 = vmatpush2.msra.mxu0 0.0
  %744 = vmatprep.subr.mxu0 0.0
  %745 = vmatpush2.msra.mxu0 0.0
  %746 = vmatprep.subr.mxu0 0.0
  %747 = vmatpush2.msra.mxu0 0.0
  %748 = vmatprep.subr.mxu0 0.0
  %749 = vmatpush2.msra.mxu0 0.0
  %750 = vmatprep.subr.mxu0 0.0
  %751 = vmatpush2.msra.mxu0 0.0
  %752 = vmatprep.subr.mxu0 0.0
  %753 = vmatpush2.msra.mxu0 0.0
  %754 = vmatprep.subr.mxu0 0.0
  %755 = vmatpush2.msra.mxu0 0.0
  %756 = vmatprep.subr.mxu0 0.0
  %757 = vmatpush2.msra.mxu0 0.0
  %758 = vmatprep.mubr.f32.mxu0 0.0
  %759 = vmatmul.mubr.f32.gmra.mxu0 %v692
  %v760 = vpop.f32.mrf.mxu0
  %v761 = vadd.f32 0.0, %v760
  %v762 = vpop.f32.mrf.mxu0
  %763 = vdwg.mxu0
  %v765 = vrot.slane %v761, 4
  %v766 = vrot.slane %v761, 5
  %v769 = vadd.f32 %v136, %v765
  %v770 = vadd.f32 %v141, %v766
  %v771 = vsub.f32 0.0, %v769
  %v772 = vsub.f32 0.0, %v770
  %v773 = vmul.f32 %v771, 1.442695
  %v774 = vpow.pop %v773
  %v775 = vmul.f32 %v772, 1.442695
  %v776 = vpow.pop %v775
  %v777 = vadd.f32 %v774, 1.0
  %v778 = vadd.f32 %v776, 1.0
  %v779 = vrcp.pop %v777
  %v780 = vrcp.pop %v778
  %v781 = vtanh.pop %v769
  %v782 = vtanh.pop %v770
  %v785 = vrot.slane %v671, 7
  %v786 = vrot.slane %v672, 7
  %v789 = vmul.f32 %v779, %v785
  %v790 = vmul.f32 %v780, %v786
  %793 = vrot.lane.b32.xlu0 %v781, 64
  %v794 = vpop.permute.xlu0 %793
  %795 = vrot.lane.b32.xlu0 %v782, 64
  %v796 = vpop.permute.xlu0 %795
  %v799 = vmul.f32 %v779, %v794
  %v800 = vmul.f32 %v780, %v796
  %803 = vrot.lane.b32.xlu0 %v799, 32
  %v804 = vpop.permute.xlu0 %803
  %805 = vrot.lane.b32.xlu0 %v800, 32
  %v806 = vpop.permute.xlu0 %805
  %v809 = vadd.f32 %v789, %v804
  %v810 = vadd.f32 %v790, %v806
  %v811 = vtanh.pop %v809
  %v812 = vtanh.pop %v810
  %815 = vrot.lane.b32.xlu0 %v811, 64
  %v816 = vpop.permute.xlu0 %815
  %817 = vrot.lane.b32.xlu0 %v812, 64
  %v818 = vpop.permute.xlu0 %817
  %v821 = vmul.f32 %v779, %v816
  %v822 = vmul.f32 %v780, %v818
  %v825 = vrot.slane %v821, 4
  %v826 = vrot.slane %v822, 3
  %v827 = vsel %vm276, %v826, %v825
  %828 = vrot.lane.b32.xlu0 %v827, 32
  %v829 = vpop.permute.xlu0 %828
  %v830 = vsel %vm62, %v829, 0
  %832 = vmatprep.subr.mxu0 0.0
  %833 = vmatpush1.msra.mxu0 0.0
  %834 = vmatprep.subr.mxu0 0.0
  %835 = vmatpush1.msra.mxu0 0.0
  %836 = vmatprep.subr.mxu0 0.0
  %837 = vmatpush1.msra.mxu0 0.0
  %838 = vmatprep.subr.mxu0 0.0
  %839 = vmatpush1.msra.mxu0 0.0
  %840 = vmatprep.subr.mxu0 0.0
  %841 = vmatpush1.msra.mxu0 0.0
  %842 = vmatprep.subr.mxu0 0.0
  %843 = vmatpush1.msra.mxu0 0.0
  %844 = vmatprep.subr.mxu0 0.0
  %845 = vmatpush1.msra.mxu0 0.0
  %846 = vmatprep.subr.mxu0 0.0
  %847 = vmatpush1.msra.mxu0 0.0
  %848 = vmatprep.subr.mxu0 0.0
  %849 = vmatpush1.msra.mxu0 0.0
  %850 = vmatprep.subr.mxu0 0.0
  %851 = vmatpush1.msra.mxu0 0.0
  %852 = vmatprep.subr.mxu0 0.0
  %853 = vmatpush1.msra.mxu0 0.0
  %854 = vmatprep.subr.mxu0 0.0
  %855 = vmatpush1.msra.mxu0 0.0
  %856 = vmatprep.subr.mxu0 0.0
  %857 = vmatpush1.msra.mxu0 %v147
  %858 = vmatprep.subr.mxu0 0.0
  %859 = vmatpush1.msra.mxu0 %v146
  %860 = vmatprep.subr.mxu0 0.0
  %861 = vmatpush1.msra.mxu0 %v145
  %862 = vmatprep.subr.mxu0 0.0
  %863 = vmatpush1.msra.mxu0 %v144
  %864 = vmatprep.subr.mxu0 0.0
  %865 = vmatpush2.msra.mxu0 0.0
  %866 = vmatprep.subr.mxu0 0.0
  %867 = vmatpush2.msra.mxu0 0.0
  %868 = vmatprep.subr.mxu0 0.0
  %869 = vmatpush2.msra.mxu0 0.0
  %870 = vmatprep.subr.mxu0 0.0
  %871 = vmatpush2.msra.mxu0 0.0
  %872 = vmatprep.subr.mxu0 0.0
  %873 = vmatpush2.msra.mxu0 0.0
  %874 = vmatprep.subr.mxu0 0.0
  %875 = vmatpush2.msra.mxu0 0.0
  %876 = vmatprep.subr.mxu0 0.0
  %877 = vmatpush2.msra.mxu0 0.0
  %878 = vmatprep.subr.mxu0 0.0
  %879 = vmatpush2.msra.mxu0 0.0
  %880 = vmatprep.subr.mxu0 0.0
  %881 = vmatpush2.msra.mxu0 0.0
  %882 = vmatprep.subr.mxu0 0.0
  %883 = vmatpush2.msra.mxu0 0.0
  %884 = vmatprep.subr.mxu0 0.0
  %885 = vmatpush2.msra.mxu0 0.0
  %886 = vmatprep.subr.mxu0 0.0
  %887 = vmatpush2.msra.mxu0 0.0
  %888 = vmatprep.subr.mxu0 0.0
  %889 = vmatpush2.msra.mxu0 0.0
  %890 = vmatprep.subr.mxu0 0.0
  %891 = vmatpush2.msra.mxu0 0.0
  %892 = vmatprep.subr.mxu0 0.0
  %893 = vmatpush2.msra.mxu0 0.0
  %894 = vmatprep.subr.mxu0 0.0
  %895 = vmatpush2.msra.mxu0 0.0
  %896 = vmatprep.mubr.f32.mxu0 0.0
  %897 = vmatmul.mubr.f32.gmra.mxu0 %v830
  %v898 = vpop.f32.mrf.mxu0
  %v899 = vadd.f32 0.0, %v898
  %v900 = vpop.f32.mrf.mxu0
  %901 = vdwg.mxu0
  %v903 = vrot.slane %v899, 3
  %v904 = vrot.slane %v899, 4
  %v907 = vadd.f32 %v136, %v903
  %v908 = vadd.f32 %v141, %v904
  %v909 = vsub.f32 0.0, %v907
  %v910 = vsub.f32 0.0, %v908
  %v911 = vmul.f32 %v909, 1.442695
  %v912 = vpow.pop %v911
  %v913 = vmul.f32 %v910, 1.442695
  %v914 = vpow.pop %v913
  %v915 = vadd.f32 %v912, 1.0
  %v916 = vadd.f32 %v914, 1.0
  %v917 = vrcp.pop %v915
  %v918 = vrcp.pop %v916
  %v919 = vtanh.pop %v907
  %v920 = vtanh.pop %v908
  %v923 = vrot.slane %v809, 7
  %v924 = vrot.slane %v810, 7
  %v927 = vmul.f32 %v917, %v923
  %v928 = vmul.f32 %v918, %v924
  %931 = vrot.lane.b32.xlu0 %v919, 64
  %v932 = vpop.permute.xlu0 %931
  %933 = vrot.lane.b32.xlu0 %v920, 64
  %v934 = vpop.permute.xlu0 %933
  %v937 = vmul.f32 %v917, %v932
  %v938 = vmul.f32 %v918, %v934
  %941 = vrot.lane.b32.xlu0 %v937, 32
  %v942 = vpop.permute.xlu0 %941
  %943 = vrot.lane.b32.xlu0 %v938, 32
  %v944 = vpop.permute.xlu0 %943
  %v947 = vadd.f32 %v927, %v942
  %v948 = vadd.f32 %v928, %v944
  %v949 = vtanh.pop %v947
  %v950 = vtanh.pop %v948
  %953 = vrot.lane.b32.xlu0 %v949, 64
  %v954 = vpop.permute.xlu0 %953
  %955 = vrot.lane.b32.xlu0 %v950, 64
  %v956 = vpop.permute.xlu0 %955
  %v959 = vmul.f32 %v917, %v954
  %v960 = vmul.f32 %v918, %v956
  %v963 = vrot.slane %v959, 5
  %v964 = vrot.slane %v960, 4
  %v965 = vsel %vm276, %v964, %v963
  %966 = vrot.lane.b32.xlu0 %v965, 32
  %v967 = vpop.permute.xlu0 %966
  %v968 = vsel %vm62, %v967, 0
  %970 = vmatprep.subr.mxu0 0.0
  %971 = vmatpush1.msra.mxu0 0.0
  %972 = vmatprep.subr.mxu0 0.0
  %973 = vmatpush1.msra.mxu0 0.0
  %974 = vmatprep.subr.mxu0 0.0
  %975 = vmatpush1.msra.mxu0 0.0
  %976 = vmatprep.subr.mxu0 0.0
  %977 = vmatpush1.msra.mxu0 0.0
  %978 = vmatprep.subr.mxu0 0.0
  %979 = vmatpush1.msra.mxu0 0.0
  %980 = vmatprep.subr.mxu0 0.0
  %981 = vmatpush1.msra.mxu0 0.0
  %982 = vmatprep.subr.mxu0 0.0
  %983 = vmatpush1.msra.mxu0 0.0
  %984 = vmatprep.subr.mxu0 0.0
  %985 = vmatpush1.msra.mxu0 0.0
  %986 = vmatprep.subr.mxu0 0.0
  %987 = vmatpush1.msra.mxu0 0.0
  %988 = vmatprep.subr.mxu0 0.0
  %989 = vmatpush1.msra.mxu0 0.0
  %990 = vmatprep.subr.mxu0 0.0
  %991 = vmatpush1.msra.mxu0 0.0
  %992 = vmatprep.subr.mxu0 0.0
  %993 = vmatpush1.msra.mxu0 0.0
  %994 = vmatprep.subr.mxu0 0.0
  %995 = vmatpush1.msra.mxu0 %v147
  %996 = vmatprep.subr.mxu0 0.0
  %997 = vmatpush1.msra.mxu0 %v146
  %998 = vmatprep.subr.mxu0 0.0
  %999 = vmatpush1.msra.mxu0 %v145
  %1000 = vmatprep.subr.mxu0 0.0
  %1001 = vmatpush1.msra.mxu0 %v144
  %1002 = vmatprep.subr.mxu0 0.0
  %1003 = vmatpush2.msra.mxu0 0.0
  %1004 = vmatprep.subr.mxu0 0.0
  %1005 = vmatpush2.msra.mxu0 0.0
  %1006 = vmatprep.subr.mxu0 0.0
  %1007 = vmatpush2.msra.mxu0 0.0
  %1008 = vmatprep.subr.mxu0 0.0
  %1009 = vmatpush2.msra.mxu0 0.0
  %1010 = vmatprep.subr.mxu0 0.0
  %1011 = vmatpush2.msra.mxu0 0.0
  %1012 = vmatprep.subr.mxu0 0.0
  %1013 = vmatpush2.msra.mxu0 0.0
  %1014 = vmatprep.subr.mxu0 0.0
  %1015 = vmatpush2.msra.mxu0 0.0
  %1016 = vmatprep.subr.mxu0 0.0
  %1017 = vmatpush2.msra.mxu0 0.0
  %1018 = vmatprep.subr.mxu0 0.0
  %1019 = vmatpush2.msra.mxu0 0.0
  %1020 = vmatprep.subr.mxu0 0.0
  %1021 = vmatpush2.msra.mxu0 0.0
  %1022 = vmatprep.subr.mxu0 0.0
  %1023 = vmatpush2.msra.mxu0 0.0
  %1024 = vmatprep.subr.mxu0 0.0
  %1025 = vmatpush2.msra.mxu0 0.0
  %1026 = vmatprep.subr.mxu0 0.0
  %1027 = vmatpush2.msra.mxu0 0.0
  %1028 = vmatprep.subr.mxu0 0.0
  %1029 = vmatpush2.msra.mxu0 0.0
  %1030 = vmatprep.subr.mxu0 0.0
  %1031 = vmatpush2.msra.mxu0 0.0
  %1032 = vmatprep.subr.mxu0 0.0
  %1033 = vmatpush2.msra.mxu0 0.0
  %1034 = vmatprep.mubr.f32.mxu0 0.0
  %1035 = vmatmul.mubr.f32.gmra.mxu0 %v968
  %v1036 = vpop.f32.mrf.mxu0
  %v1037 = vadd.f32 0.0, %v1036
  %v1038 = vpop.f32.mrf.mxu0
  %1039 = vdwg.mxu0
  %v1041 = vrot.slane %v1037, 2
  %v1042 = vrot.slane %v1037, 3
  %v1045 = vadd.f32 %v136, %v1041
  %v1046 = vadd.f32 %v141, %v1042
  %v1047 = vsub.f32 0.0, %v1045
  %v1048 = vsub.f32 0.0, %v1046
  %v1049 = vmul.f32 %v1047, 1.442695
  %v1050 = vpow.pop %v1049
  %v1051 = vmul.f32 %v1048, 1.442695
  %v1052 = vpow.pop %v1051
  %v1053 = vadd.f32 %v1050, 1.0
  %v1054 = vadd.f32 %v1052, 1.0
  %v1055 = vrcp.pop %v1053
  %v1056 = vrcp.pop %v1054
  %v1057 = vtanh.pop %v1045
  %v1058 = vtanh.pop %v1046
  %v1061 = vrot.slane %v947, 7
  %v1062 = vrot.slane %v948, 7
  %v1065 = vmul.f32 %v1055, %v1061
  %v1066 = vmul.f32 %v1056, %v1062
  %1069 = vrot.lane.b32.xlu0 %v1057, 64
  %v1070 = vpop.permute.xlu0 %1069
  %1071 = vrot.lane.b32.xlu0 %v1058, 64
  %v1072 = vpop.permute.xlu0 %1071
  %v1075 = vmul.f32 %v1055, %v1070
  %v1076 = vmul.f32 %v1056, %v1072
  %1079 = vrot.lane.b32.xlu0 %v1075, 32
  %v1080 = vpop.permute.xlu0 %1079
  %1081 = vrot.lane.b32.xlu0 %v1076, 32
  %v1082 = vpop.permute.xlu0 %1081
  %v1085 = vadd.f32 %v1065, %v1080
  %v1086 = vadd.f32 %v1066, %v1082
  %v1087 = vtanh.pop %v1085
  %v1088 = vtanh.pop %v1086
  %1091 = vrot.lane.b32.xlu0 %v1087, 64
  %v1092 = vpop.permute.xlu0 %1091
  %1093 = vrot.lane.b32.xlu0 %v1088, 64
  %v1094 = vpop.permute.xlu0 %1093
  %v1097 = vmul.f32 %v1055, %v1092
  %v1098 = vmul.f32 %v1056, %v1094
  %v1101 = vrot.slane %v1097, 6
  %v1102 = vrot.slane %v1098, 5
  %v1103 = vsel %vm276, %v1102, %v1101
  %1104 = vrot.lane.b32.xlu0 %v1103, 32
  %v1105 = vpop.permute.xlu0 %1104
  %v1106 = vsel %vm62, %v1105, 0
  %1108 = vmatprep.subr.mxu0 0.0
  %1109 = vmatpush1.msra.mxu0 0.0
  %1110 = vmatprep.subr.mxu0 0.0
  %1111 = vmatpush1.msra.mxu0 0.0
  %1112 = vmatprep.subr.mxu0 0.0
  %1113 = vmatpush1.msra.mxu0 0.0
  %1114 = vmatprep.subr.mxu0 0.0
  %1115 = vmatpush1.msra.mxu0 0.0
  %1116 = vmatprep.subr.mxu0 0.0
  %1117 = vmatpush1.msra.mxu0 0.0
  %1118 = vmatprep.subr.mxu0 0.0
  %1119 = vmatpush1.msra.mxu0 0.0
  %1120 = vmatprep.subr.mxu0 0.0
  %1121 = vmatpush1.msra.mxu0 0.0
  %1122 = vmatprep.subr.mxu0 0.0
  %1123 = vmatpush1.msra.mxu0 0.0
  %1124 = vmatprep.subr.mxu0 0.0
  %1125 = vmatpush1.msra.mxu0 0.0
  %1126 = vmatprep.subr.mxu0 0.0
  %1127 = vmatpush1.msra.mxu0 0.0
  %1128 = vmatprep.subr.mxu0 0.0
  %1129 = vmatpush1.msra.mxu0 0.0
  %1130 = vmatprep.subr.mxu0 0.0
  %1131 = vmatpush1.msra.mxu0 0.0
  %1132 = vmatprep.subr.mxu0 0.0
  %1133 = vmatpush1.msra.mxu0 %v147
  %1134 = vmatprep.subr.mxu0 0.0
  %1135 = vmatpush1.msra.mxu0 %v146
  %1136 = vmatprep.subr.mxu0 0.0
  %1137 = vmatpush1.msra.mxu0 %v145
  %1138 = vmatprep.subr.mxu0 0.0
  %1139 = vmatpush1.msra.mxu0 %v144
  %1140 = vmatprep.subr.mxu0 0.0
  %1141 = vmatpush2.msra.mxu0 0.0
  %1142 = vmatprep.subr.mxu0 0.0
  %1143 = vmatpush2.msra.mxu0 0.0
  %1144 = vmatprep.subr.mxu0 0.0
  %1145 = vmatpush2.msra.mxu0 0.0
  %1146 = vmatprep.subr.mxu0 0.0
  %1147 = vmatpush2.msra.mxu0 0.0
  %1148 = vmatprep.subr.mxu0 0.0
  %1149 = vmatpush2.msra.mxu0 0.0
  %1150 = vmatprep.subr.mxu0 0.0
  %1151 = vmatpush2.msra.mxu0 0.0
  %1152 = vmatprep.subr.mxu0 0.0
  %1153 = vmatpush2.msra.mxu0 0.0
  %1154 = vmatprep.subr.mxu0 0.0
  %1155 = vmatpush2.msra.mxu0 0.0
  %1156 = vmatprep.subr.mxu0 0.0
  %1157 = vmatpush2.msra.mxu0 0.0
  %1158 = vmatprep.subr.mxu0 0.0
  %1159 = vmatpush2.msra.mxu0 0.0
  %1160 = vmatprep.subr.mxu0 0.0
  %1161 = vmatpush2.msra.mxu0 0.0
  %1162 = vmatprep.subr.mxu0 0.0
  %1163 = vmatpush2.msra.mxu0 0.0
  %1164 = vmatprep.subr.mxu0 0.0
  %1165 = vmatpush2.msra.mxu0 0.0
  %1166 = vmatprep.subr.mxu0 0.0
  %1167 = vmatpush2.msra.mxu0 0.0
  %1168 = vmatprep.subr.mxu0 0.0
  %1169 = vmatpush2.msra.mxu0 0.0
  %1170 = vmatprep.subr.mxu0 0.0
  %1171 = vmatpush2.msra.mxu0 0.0
  %1172 = vmatprep.mubr.f32.mxu0 0.0
  %1173 = vmatmul.mubr.f32.gmra.mxu0 %v1106
  %v1174 = vpop.f32.mrf.mxu0
  %v1175 = vadd.f32 0.0, %v1174
  %v1176 = vpop.f32.mrf.mxu0
  %1177 = vdwg.mxu0
  %v1179 = vrot.slane %v1175, 1
  %v1180 = vrot.slane %v1175, 2
  %v1183 = vadd.f32 %v136, %v1179
  %v1184 = vadd.f32 %v141, %v1180
  %v1185 = vsub.f32 0.0, %v1183
  %v1186 = vsub.f32 0.0, %v1184
  %v1187 = vmul.f32 %v1185, 1.442695
  %v1188 = vpow.pop %v1187
  %v1189 = vmul.f32 %v1186, 1.442695
  %v1190 = vpow.pop %v1189
  %v1191 = vadd.f32 %v1188, 1.0
  %v1192 = vadd.f32 %v1190, 1.0
  %v1193 = vrcp.pop %v1191
  %v1194 = vrcp.pop %v1192
  %v1195 = vtanh.pop %v1183
  %v1196 = vtanh.pop %v1184
  %v1199 = vrot.slane %v1085, 7
  %v1200 = vrot.slane %v1086, 7
  %v1203 = vmul.f32 %v1193, %v1199
  %v1204 = vmul.f32 %v1194, %v1200
  %1207 = vrot.lane.b32.xlu0 %v1195, 64
  %v1208 = vpop.permute.xlu0 %1207
  %1209 = vrot.lane.b32.xlu0 %v1196, 64
  %v1210 = vpop.permute.xlu0 %1209
  %v1213 = vmul.f32 %v1193, %v1208
  %v1214 = vmul.f32 %v1194, %v1210
  %1217 = vrot.lane.b32.xlu0 %v1213, 32
  %v1218 = vpop.permute.xlu0 %1217
  %1219 = vrot.lane.b32.xlu0 %v1214, 32
  %v1220 = vpop.permute.xlu0 %1219
  %v1223 = vadd.f32 %v1203, %v1218
  %v1224 = vadd.f32 %v1204, %v1220
  %v1225 = vtanh.pop %v1223
  %v1226 = vtanh.pop %v1224
  %1229 = vrot.lane.b32.xlu0 %v1225, 64
  %v1230 = vpop.permute.xlu0 %1229
  %1231 = vrot.lane.b32.xlu0 %v1226, 64
  %v1232 = vpop.permute.xlu0 %1231
  %v1235 = vmul.f32 %v1193, %v1230
  %v1236 = vmul.f32 %v1194, %v1232
  %v1238 = vrot.slane %v408, 7
  %v1239 = vrot.slane %v409, 6
  %vm1240 = vcmask 1043459
  %v1241 = vsel %vm1240, %v1239, %v1238
  %v1243 = vrot.slane %v545, 6
  %v1244 = vrot.slane %v546, 5
  %vm1245 = vcmask 1045509
  %v1246 = vsel %vm1245, %v1244, %v1243
  %v1248 = vrot.slane %v683, 5
  %v1249 = vrot.slane %v684, 4
  %vm1250 = vcmask 1047559
  %v1251 = vsel %vm1250, %v1249, %v1248
  %v1254 = vrot.slane %v959, 3
  %v1255 = vrot.slane %v960, 2
  %v1256 = vsel %vm1240, %v1255, %v1254
  %v1258 = vrot.slane %v1097, 2
  %v1259 = vrot.slane %v1098, 1
  %v1260 = vsel %vm1245, %v1259, %v1258
  %v1264 = vrot.slane %v1235, 1
  %v1265 = vsel %vm1250, %v1236, %v1264
  %vm1267 = vcmask 1041408
  %v1268 = vsel %vm1267, %v277, %v1241
  %vm1269 = vcmask 1043456
  %v1270 = vsel %vm1269, %v1268, %v1246
  %vm1271 = vcmask 1045504
  %v1272 = vsel %vm1271, %v1270, %v1251
  %v1273 = vsel %vm1267, %v827, %v1256
  %v1274 = vsel %vm1269, %v1273, %v1260
  %v1275 = vsel %vm1271, %v1274, %v1265
  %v1276 = vlaneseq
  %v1277 = vshrl.u32 %v1276, 7
  %v1278 = vadd.s32 %v1277, 8
  %vm1279 = vcmp.ge.s32.totalorder %v1277, 2
  %vm1280 = vcmp.ge.s32.totalorder %v1278, 2
  %1283 = vrot.lane.b32.xlu0 %v1272, 32
  %v1284 = vpop.permute.xlu0 %1283
  %1285 = vrot.lane.b32.xlu0 %v1275, 32
  %v1286 = vpop.permute.xlu0 %1285
  %v1289 = vrot.slane %v1284, 6
  %v1290 = vrot.slane %v1286, 6
  %vm1291 = vcmp.lt.s32.totalorder %v1277, 2
  %v1292 = vsel %vm1291, %v1289, %v1290
  %v1293 = vsel %vm1291, %v1290, %v1289
  %v1294 = vsel %vm1279, 1, 0
  %v1295 = vsel %vm1280, 1, 0
  %vm1296 = vcmp.eq.s32.totalorder %v1294, 1
  %vm1297 = vcmp.eq.s32.totalorder %v1295, 1
  %v1298 = vsel %vm1296, %v1293, 0.0
  %v1299 = vsel %vm1297, %v1292, 0.0
  %v1300 = vld [vmem:[%s4] sm:$0xff]
  %v1301 = vld [vmem:[%s4 + $0x8] sm:$0xff]
  %v1302 = vld [vmem:[%s4 + $0x10] sm:$0xff]
  %v1303 = vld [vmem:[%s4 + $0x18] sm:$0xff]
  %v1304 = vld [vmem:[%s5] sm:$0xff]
  %v1305 = vld [vmem:[%s5 + $0x8] sm:$0xff]
  %v1306 = vld [vmem:[%s5 + $0x10] sm:$0xff]
  %v1307 = vld [vmem:[%s5 + $0x18] sm:$0xff]
  %v1308 = vsel %vm62, %v1284, 0
  %v1310 = vsel %vm62, %v1286, 0
  %1312 = vmatprep.subr.mxu0 0.0
  %1313 = vmatpush1.msra.mxu0 0.0
  %1314 = vmatprep.subr.mxu0 0.0
  %1315 = vmatpush1.msra.mxu0 0.0
  %1316 = vmatprep.subr.mxu0 0.0
  %1317 = vmatpush1.msra.mxu0 0.0
  %1318 = vmatprep.subr.mxu0 0.0
  %1319 = vmatpush1.msra.mxu0 0.0
  %1320 = vmatprep.subr.mxu0 0.0
  %1321 = vmatpush1.msra.mxu0 0.0
  %1322 = vmatprep.subr.mxu0 0.0
  %1323 = vmatpush1.msra.mxu0 0.0
  %1324 = vmatprep.subr.mxu0 0.0
  %1325 = vmatpush1.msra.mxu0 0.0
  %1326 = vmatprep.subr.mxu0 0.0
  %1327 = vmatpush1.msra.mxu0 0.0
  %1328 = vmatprep.subr.mxu0 0.0
  %1329 = vmatpush1.msra.mxu0 0.0
  %1330 = vmatprep.subr.mxu0 0.0
  %1331 = vmatpush1.msra.mxu0 0.0
  %1332 = vmatprep.subr.mxu0 0.0
  %1333 = vmatpush1.msra.mxu0 0.0
  %1334 = vmatprep.subr.mxu0 0.0
  %1335 = vmatpush1.msra.mxu0 0.0
  %1336 = vmatprep.subr.mxu0 0.0
  %1337 = vmatpush1.msra.mxu0 %v1307
  %1338 = vmatprep.subr.mxu0 0.0
  %1339 = vmatpush1.msra.mxu0 %v1306
  %1340 = vmatprep.subr.mxu0 0.0
  %1341 = vmatpush1.msra.mxu0 %v1305
  %1342 = vmatprep.subr.mxu0 0.0
  %1343 = vmatpush1.msra.mxu0 %v1304
  %1344 = vmatprep.subr.mxu0 0.0
  %1345 = vmatpush2.msra.mxu0 0.0
  %1346 = vmatprep.subr.mxu0 0.0
  %1347 = vmatpush2.msra.mxu0 0.0
  %1348 = vmatprep.subr.mxu0 0.0
  %1349 = vmatpush2.msra.mxu0 0.0
  %1350 = vmatprep.subr.mxu0 0.0
  %1351 = vmatpush2.msra.mxu0 0.0
  %1352 = vmatprep.subr.mxu0 0.0
  %1353 = vmatpush2.msra.mxu0 0.0
  %1354 = vmatprep.subr.mxu0 0.0
  %1355 = vmatpush2.msra.mxu0 0.0
  %1356 = vmatprep.subr.mxu0 0.0
  %1357 = vmatpush2.msra.mxu0 0.0
  %1358 = vmatprep.subr.mxu0 0.0
  %1359 = vmatpush2.msra.mxu0 0.0
  %1360 = vmatprep.subr.mxu0 0.0
  %1361 = vmatpush2.msra.mxu0 0.0
  %1362 = vmatprep.subr.mxu0 0.0
  %1363 = vmatpush2.msra.mxu0 0.0
  %1364 = vmatprep.subr.mxu0 0.0
  %1365 = vmatpush2.msra.mxu0 0.0
  %1366 = vmatprep.subr.mxu0 0.0
  %1367 = vmatpush2.msra.mxu0 0.0
  %1368 = vmatprep.subr.mxu0 0.0
  %1369 = vmatpush2.msra.mxu0 0.0
  %1370 = vmatprep.subr.mxu0 0.0
  %1371 = vmatpush2.msra.mxu0 0.0
  %1372 = vmatprep.subr.mxu0 0.0
  %1373 = vmatpush2.msra.mxu0 0.0
  %1374 = vmatprep.subr.mxu0 0.0
  %1375 = vmatpush2.msra.mxu0 0.0
  %1376 = vmatprep.mubr.f32.mxu0 0.0
  %1377 = vmatmul.mubr.f32.gmra.mxu0 %v1308
  %v1378 = vpop.f32.mrf.mxu0
  %v1379 = vadd.f32 0.0, %v1378
  %v1380 = vpop.f32.mrf.mxu0
  %1381 = vmatprep.mubr.f32.mxu0 0.0
  %1382 = vmatmul.mubr.f32.gmra.mxu0 %v1310
  %v1383 = vpop.f32.mrf.mxu0
  %v1384 = vadd.f32 0.0, %v1383
  %v1385 = vpop.f32.mrf.mxu0
  %1386 = vdwg.mxu0
  %v1388 = vsel %vm62, %v1298, 0
  %v1391 = vsel %vm62, %v1299, 0
  %1393 = vmatprep.subr.mxu0 0.0
  %1394 = vmatpush1.msra.mxu0 0.0
  %1395 = vmatprep.subr.mxu0 0.0
  %1396 = vmatpush1.msra.mxu0 0.0
  %1397 = vmatprep.subr.mxu0 0.0
  %1398 = vmatpush1.msra.mxu0 0.0
  %1399 = vmatprep.subr.mxu0 0.0
  %1400 = vmatpush1.msra.mxu0 0.0
  %1401 = vmatprep.subr.mxu0 0.0
  %1402 = vmatpush1.msra.mxu0 0.0
  %1403 = vmatprep.subr.mxu0 0.0
  %1404 = vmatpush1.msra.mxu0 0.0
  %1405 = vmatprep.subr.mxu0 0.0
  %1406 = vmatpush1.msra.mxu0 0.0
  %1407 = vmatprep.subr.mxu0 0.0
  %1408 = vmatpush1.msra.mxu0 0.0
  %1409 = vmatprep.subr.mxu0 0.0
  %1410 = vmatpush1.msra.mxu0 0.0
  %1411 = vmatprep.subr.mxu0 0.0
  %1412 = vmatpush1.msra.mxu0 0.0
  %1413 = vmatprep.subr.mxu0 0.0
  %1414 = vmatpush1.msra.mxu0 0.0
  %1415 = vmatprep.subr.mxu0 0.0
  %1416 = vmatpush1.msra.mxu0 0.0
  %1417 = vmatprep.subr.mxu0 0.0
  %1418 = vmatpush1.msra.mxu0 %v1303
  %1419 = vmatprep.subr.mxu0 0.0
  %1420 = vmatpush1.msra.mxu0 %v1302
  %1421 = vmatprep.subr.mxu0 0.0
  %1422 = vmatpush1.msra.mxu0 %v1301
  %1423 = vmatprep.subr.mxu0 0.0
  %1424 = vmatpush1.msra.mxu0 %v1300
  %1425 = vmatprep.subr.mxu0 0.0
  %1426 = vmatpush2.msra.mxu0 0.0
  %1427 = vmatprep.subr.mxu0 0.0
  %1428 = vmatpush2.msra.mxu0 0.0
  %1429 = vmatprep.subr.mxu0 0.0
  %1430 = vmatpush2.msra.mxu0 0.0
  %1431 = vmatprep.subr.mxu0 0.0
  %1432 = vmatpush2.msra.mxu0 0.0
  %1433 = vmatprep.subr.mxu0 0.0
  %1434 = vmatpush2.msra.mxu0 0.0
  %1435 = vmatprep.subr.mxu0 0.0
  %1436 = vmatpush2.msra.mxu0 0.0
  %1437 = vmatprep.subr.mxu0 0.0
  %1438 = vmatpush2.msra.mxu0 0.0
  %1439 = vmatprep.subr.mxu0 0.0
  %1440 = vmatpush2.msra.mxu0 0.0
  %1441 = vmatprep.subr.mxu0 0.0
  %1442 = vmatpush2.msra.mxu0 0.0
  %1443 = vmatprep.subr.mxu0 0.0
  %1444 = vmatpush2.msra.mxu0 0.0
  %1445 = vmatprep.subr.mxu0 0.0
  %1446 = vmatpush2.msra.mxu0 0.0
  %1447 = vmatprep.subr.mxu0 0.0
  %1448 = vmatpush2.msra.mxu0 0.0
  %1449 = vmatprep.subr.mxu0 0.0
  %1450 = vmatpush2.msra.mxu0 0.0
  %1451 = vmatprep.subr.mxu0 0.0
  %1452 = vmatpush2.msra.mxu0 0.0
  %1453 = vmatprep.subr.mxu0 0.0
  %1454 = vmatpush2.msra.mxu0 0.0
  %1455 = vmatprep.subr.mxu0 0.0
  %1456 = vmatpush2.msra.mxu0 0.0
  %1457 = vmatprep.mubr.f32.mxu0 0.0
  %1458 = vmatmul.mubr.f32.gmra.mxu0 %v1388
  %v1459 = vpop.f32.mrf.mxu0
  %v1460 = vadd.f32 %v1379, %v1459
  %v1461 = vpop.f32.mrf.mxu0
  %1462 = vmatprep.mubr.f32.mxu0 0.0
  %1463 = vmatmul.mubr.f32.gmra.mxu0 %v1391
  %v1464 = vpop.f32.mrf.mxu0
  %v1465 = vadd.f32 %v1384, %v1464
  %v1466 = vpop.f32.mrf.mxu0
  %1467 = vdwg.mxu0
  %v1468 = vld [vmem:[%s6] sm:$0x1]
  %v1470 = vlaneseq
  %v1471 = vshrl.u32 %v1470, 7
  %v1472 = vsub.s32 0, %v1471
  %v1473 = vrot.slane %v1468, %v1472
  %v1475 = vadd.f32 %v1460, %v1473
  %v1476 = vadd.f32 %v1465, %v1473
  %v1477 = vmax.f32 %v1475, 0.0
  %v1478 = vmax.f32 %v1476, 0.0
  %v1479 = vld [vmem:[%s7] sm:$0xff]
  %v1480 = vld [vmem:[%s7 + $0x8] sm:$0xff]
  %v1481 = vld [vmem:[%s7 + $0x10] sm:$0xff]
  %v1482 = vld [vmem:[%s7 + $0x18] sm:$0xff]
  %v1483 = vld [vmem:[%s8] sm:$0x1]
  %v1485 = vlaneseq
  %v1486 = vshrl.u32 %v1485, 7
  %v1487 = vsub.s32 0, %v1486
  %v1488 = vrot.slane %v1483, %v1487
  %1490 = vmatprep.subr.mxu0 0.0
  %1491 = vmatpush1.msra.mxu0 0.0
  %1492 = vmatprep.subr.mxu0 0.0
  %1493 = vmatpush1.msra.mxu0 0.0
  %1494 = vmatprep.subr.mxu0 0.0
  %1495 = vmatpush1.msra.mxu0 0.0
  %1496 = vmatprep.subr.mxu0 0.0
  %1497 = vmatpush1.msra.mxu0 0.0
  %1498 = vmatprep.subr.mxu0 0.0
  %1499 = vmatpush1.msra.mxu0 0.0
  %1500 = vmatprep.subr.mxu0 0.0
  %1501 = vmatpush1.msra.mxu0 0.0
  %1502 = vmatprep.subr.mxu0 0.0
  %1503 = vmatpush1.msra.mxu0 0.0
  %1504 = vmatprep.subr.mxu0 0.0
  %1505 = vmatpush1.msra.mxu0 0.0
  %1506 = vmatprep.subr.mxu0 0.0
  %1507 = vmatpush1.msra.mxu0 0.0
  %1508 = vmatprep.subr.mxu0 0.0
  %1509 = vmatpush1.msra.mxu0 0.0
  %1510 = vmatprep.subr.mxu0 0.0
  %1511 = vmatpush1.msra.mxu0 0.0
  %1512 = vmatprep.subr.mxu0 0.0
  %1513 = vmatpush1.msra.mxu0 0.0
  %1514 = vmatprep.subr.mxu0 0.0
  %1515 = vmatpush1.msra.mxu0 %v1482
  %1516 = vmatprep.subr.mxu0 0.0
  %1517 = vmatpush1.msra.mxu0 %v1481
  %1518 = vmatprep.subr.mxu0 0.0
  %1519 = vmatpush1.msra.mxu0 %v1480
  %1520 = vmatprep.subr.mxu0 0.0
  %1521 = vmatpush1.msra.mxu0 %v1479
  %1522 = vmatprep.subr.mxu0 0.0
  %1523 = vmatpush2.msra.mxu0 0.0
  %1524 = vmatprep.subr.mxu0 0.0
  %1525 = vmatpush2.msra.mxu0 0.0
  %1526 = vmatprep.subr.mxu0 0.0
  %1527 = vmatpush2.msra.mxu0 0.0
  %1528 = vmatprep.subr.mxu0 0.0
  %1529 = vmatpush2.msra.mxu0 0.0
  %1530 = vmatprep.subr.mxu0 0.0
  %1531 = vmatpush2.msra.mxu0 0.0
  %1532 = vmatprep.subr.mxu0 0.0
  %1533 = vmatpush2.msra.mxu0 0.0
  %1534 = vmatprep.subr.mxu0 0.0
  %1535 = vmatpush2.msra.mxu0 0.0
  %1536 = vmatprep.subr.mxu0 0.0
  %1537 = vmatpush2.msra.mxu0 0.0
  %1538 = vmatprep.subr.mxu0 0.0
  %1539 = vmatpush2.msra.mxu0 0.0
  %1540 = vmatprep.subr.mxu0 0.0
  %1541 = vmatpush2.msra.mxu0 0.0
  %1542 = vmatprep.subr.mxu0 0.0
  %1543 = vmatpush2.msra.mxu0 0.0
  %1544 = vmatprep.subr.mxu0 0.0
  %1545 = vmatpush2.msra.mxu0 0.0
  %1546 = vmatprep.subr.mxu0 0.0
  %1547 = vmatpush2.msra.mxu0 0.0
  %1548 = vmatprep.subr.mxu0 0.0
  %1549 = vmatpush2.msra.mxu0 0.0
  %1550 = vmatprep.subr.mxu0 0.0
  %1551 = vmatpush2.msra.mxu0 0.0
  %1552 = vmatprep.subr.mxu0 0.0
  %1553 = vmatpush2.msra.mxu0 0.0
  %1554 = vmatprep.mubr.f32.mxu0 0.0
  %1555 = vmatmul.mubr.f32.gmra.mxu0 %v1308
  %v1556 = vpop.f32.mrf.mxu0
  %v1557 = vadd.f32 %v1488, %v1556
  %v1558 = vpop.f32.mrf.mxu0
  %1559 = vmatprep.mubr.f32.mxu0 0.0
  %1560 = vmatmul.mubr.f32.gmra.mxu0 %v1310
  %v1561 = vpop.f32.mrf.mxu0
  %v1562 = vadd.f32 %v1488, %v1561
  %v1563 = vpop.f32.mrf.mxu0
  %1564 = vdwg.mxu0
  %v1565 = vrot.slane %v1477, 6
  %v1566 = vrot.slane %v1478, 6
  %v1567 = vsel %vm1291, %v1565, %v1566
  %v1568 = vsel %vm1291, %v1566, %v1565
  %v1569 = vsel %vm1296, %v1568, 0.0
  %v1570 = vsel %vm1297, %v1567, 0.0
  %v1571 = vld [vmem:[%s9] sm:$0xff]
  %v1572 = vld [vmem:[%s9 + $0x8] sm:$0xff]
  %v1573 = vld [vmem:[%s10] sm:$0xff]
  %v1574 = vld [vmem:[%s10 + $0x8] sm:$0xff]
  %vm1575 = vcmask 130048
  %v1577 = vsel %vm1575, %v1477, 0
  %v1580 = vsel %vm1575, %v1478, 0
  %1582 = vmatprep.subr.mxu0 0.0
  %1583 = vmatpush1.msra.mxu0 0.0
  %1584 = vmatprep.subr.mxu0 0.0
  %1585 = vmatpush1.msra.mxu0 0.0
  %1586 = vmatprep.subr.mxu0 0.0
  %1587 = vmatpush1.msra.mxu0 0.0
  %1588 = vmatprep.subr.mxu0 0.0
  %1589 = vmatpush1.msra.mxu0 0.0
  %1590 = vmatprep.subr.mxu0 0.0
  %1591 = vmatpush1.msra.mxu0 0.0
  %1592 = vmatprep.subr.mxu0 0.0
  %1593 = vmatpush1.msra.mxu0 0.0
  %1594 = vmatprep.subr.mxu0 0.0
  %1595 = vmatpush1.msra.mxu0 0.0
  %1596 = vmatprep.subr.mxu0 0.0
  %1597 = vmatpush1.msra.mxu0 0.0
  %1598 = vmatprep.subr.mxu0 0.0
  %1599 = vmatpush1.msra.mxu0 0.0
  %1600 = vmatprep.subr.mxu0 0.0
  %1601 = vmatpush1.msra.mxu0 0.0
  %1602 = vmatprep.subr.mxu0 0.0
  %1603 = vmatpush1.msra.mxu0 0.0
  %1604 = vmatprep.subr.mxu0 0.0
  %1605 = vmatpush1.msra.mxu0 0.0
  %1606 = vmatprep.subr.mxu0 0.0
  %1607 = vmatpush1.msra.mxu0 0.0
  %1608 = vmatprep.subr.mxu0 0.0
  %1609 = vmatpush1.msra.mxu0 0.0
  %1610 = vmatprep.subr.mxu0 0.0
  %1611 = vmatpush1.msra.mxu0 %v1574
  %1612 = vmatprep.subr.mxu0 0.0
  %1613 = vmatpush1.msra.mxu0 %v1573
  %1614 = vmatprep.subr.mxu0 0.0
  %1615 = vmatpush2.msra.mxu0 0.0
  %1616 = vmatprep.subr.mxu0 0.0
  %1617 = vmatpush2.msra.mxu0 0.0
  %1618 = vmatprep.subr.mxu0 0.0
  %1619 = vmatpush2.msra.mxu0 0.0
  %1620 = vmatprep.subr.mxu0 0.0
  %1621 = vmatpush2.msra.mxu0 0.0
  %1622 = vmatprep.subr.mxu0 0.0
  %1623 = vmatpush2.msra.mxu0 0.0
  %1624 = vmatprep.subr.mxu0 0.0
  %1625 = vmatpush2.msra.mxu0 0.0
  %1626 = vmatprep.subr.mxu0 0.0
  %1627 = vmatpush2.msra.mxu0 0.0
  %1628 = vmatprep.subr.mxu0 0.0
  %1629 = vmatpush2.msra.mxu0 0.0
  %1630 = vmatprep.subr.mxu0 0.0
  %1631 = vmatpush2.msra.mxu0 0.0
  %1632 = vmatprep.subr.mxu0 0.0
  %1633 = vmatpush2.msra.mxu0 0.0
  %1634 = vmatprep.subr.mxu0 0.0
  %1635 = vmatpush2.msra.mxu0 0.0
  %1636 = vmatprep.subr.mxu0 0.0
  %1637 = vmatpush2.msra.mxu0 0.0
  %1638 = vmatprep.subr.mxu0 0.0
  %1639 = vmatpush2.msra.mxu0 0.0
  %1640 = vmatprep.subr.mxu0 0.0
  %1641 = vmatpush2.msra.mxu0 0.0
  %1642 = vmatprep.subr.mxu0 0.0
  %1643 = vmatpush2.msra.mxu0 0.0
  %1644 = vmatprep.subr.mxu0 0.0
  %1645 = vmatpush2.msra.mxu0 0.0
  %1646 = vmatprep.mubr.f32.mxu0 0.0
  %1647 = vmatmul.mubr.f32.gmra.mxu0 %v1577
  %v1648 = vpop.f32.mrf.mxu0
  %v1649 = vadd.f32 0.0, %v1648
  %v1650 = vpop.f32.mrf.mxu0
  %1651 = vmatprep.mubr.f32.mxu0 0.0
  %1652 = vmatmul.mubr.f32.gmra.mxu0 %v1580
  %v1653 = vpop.f32.mrf.mxu0
  %v1654 = vadd.f32 0.0, %v1653
  %v1655 = vpop.f32.mrf.mxu0
  %1656 = vdwg.mxu0
  %v1658 = vsel %vm1575, %v1569, 0
  %v1661 = vsel %vm1575, %v1570, 0
  %1663 = vmatprep.subr.mxu0 0.0
  %1664 = vmatpush1.msra.mxu0 0.0
  %1665 = vmatprep.subr.mxu0 0.0
  %1666 = vmatpush1.msra.mxu0 0.0
  %1667 = vmatprep.subr.mxu0 0.0
  %1668 = vmatpush1.msra.mxu0 0.0
  %1669 = vmatprep.subr.mxu0 0.0
  %1670 = vmatpush1.msra.mxu0 0.0
  %1671 = vmatprep.subr.mxu0 0.0
  %1672 = vmatpush1.msra.mxu0 0.0
  %1673 = vmatprep.subr.mxu0 0.0
  %1674 = vmatpush1.msra.mxu0 0.0
  %1675 = vmatprep.subr.mxu0 0.0
  %1676 = vmatpush1.msra.mxu0 0.0
  %1677 = vmatprep.subr.mxu0 0.0
  %1678 = vmatpush1.msra.mxu0 0.0
  %1679 = vmatprep.subr.mxu0 0.0
  %1680 = vmatpush1.msra.mxu0 0.0
  %1681 = vmatprep.subr.mxu0 0.0
  %1682 = vmatpush1.msra.mxu0 0.0
  %1683 = vmatprep.subr.mxu0 0.0
  %1684 = vmatpush1.msra.mxu0 0.0
  %1685 = vmatprep.subr.mxu0 0.0
  %1686 = vmatpush1.msra.mxu0 0.0
  %1687 = vmatprep.subr.mxu0 0.0
  %1688 = vmatpush1.msra.mxu0 0.0
  %1689 = vmatprep.subr.mxu0 0.0
  %1690 = vmatpush1.msra.mxu0 0.0
  %1691 = vmatprep.subr.mxu0 0.0
  %1692 = vmatpush1.msra.mxu0 %v1572
  %1693 = vmatprep.subr.mxu0 0.0
  %1694 = vmatpush1.msra.mxu0 %v1571
  %1695 = vmatprep.subr.mxu0 0.0
  %1696 = vmatpush2.msra.mxu0 0.0
  %1697 = vmatprep.subr.mxu0 0.0
  %1698 = vmatpush2.msra.mxu0 0.0
  %1699 = vmatprep.subr.mxu0 0.0
  %1700 = vmatpush2.msra.mxu0 0.0
  %1701 = vmatprep.subr.mxu0 0.0
  %1702 = vmatpush2.msra.mxu0 0.0
  %1703 = vmatprep.subr.mxu0 0.0
  %1704 = vmatpush2.msra.mxu0 0.0
  %1705 = vmatprep.subr.mxu0 0.0
  %1706 = vmatpush2.msra.mxu0 0.0
  %1707 = vmatprep.subr.mxu0 0.0
  %1708 = vmatpush2.msra.mxu0 0.0
  %1709 = vmatprep.subr.mxu0 0.0
  %1710 = vmatpush2.msra.mxu0 0.0
  %1711 = vmatprep.subr.mxu0 0.0
  %1712 = vmatpush2.msra.mxu0 0.0
  %1713 = vmatprep.subr.mxu0 0.0
  %1714 = vmatpush2.msra.mxu0 0.0
  %1715 = vmatprep.subr.mxu0 0.0
  %1716 = vmatpush2.msra.mxu0 0.0
  %1717 = vmatprep.subr.mxu0 0.0
  %1718 = vmatpush2.msra.mxu0 0.0
  %1719 = vmatprep.subr.mxu0 0.0
  %1720 = vmatpush2.msra.mxu0 0.0
  %1721 = vmatprep.subr.mxu0 0.0
  %1722 = vmatpush2.msra.mxu0 0.0
  %1723 = vmatprep.subr.mxu0 0.0
  %1724 = vmatpush2.msra.mxu0 0.0
  %1725 = vmatprep.subr.mxu0 0.0
  %1726 = vmatpush2.msra.mxu0 0.0
  %1727 = vmatprep.mubr.f32.mxu0 0.0
  %1728 = vmatmul.mubr.f32.gmra.mxu0 %v1658
  %v1729 = vpop.f32.mrf.mxu0
  %v1730 = vadd.f32 %v1649, %v1729
  %v1731 = vpop.f32.mrf.mxu0
  %1732 = vmatprep.mubr.f32.mxu0 0.0
  %1733 = vmatmul.mubr.f32.gmra.mxu0 %v1661
  %v1734 = vpop.f32.mrf.mxu0
  %v1735 = vadd.f32 %v1654, %v1734
  %v1736 = vpop.f32.mrf.mxu0
  %1737 = vdwg.mxu0
  %v1738 = vld [vmem:[%s11] sm:$0x1]
  %v1740 = vlaneseq
  %v1741 = vshrl.u32 %v1740, 7
  %v1742 = vsub.s32 0, %v1741
  %v1743 = vrot.slane %v1738, %v1742
  %v1745 = vadd.f32 %v1730, %v1743
  %v1746 = vadd.f32 %v1735, %v1743
  %v1747 = vmax.f32 %v1745, 0.0
  %v1748 = vmax.f32 %v1746, 0.0
  %v1749 = vadd.f32 %v1747, %v1557
  %v1750 = vadd.f32 %v1748, %v1562
  %v1751 = vmax.f32 %v1749, 0.0
  %v1752 = vmax.f32 %v1750, 0.0
  %v1753 = vld [vmem:[%s12] sm:$0x1]
  %v1755 = vlaneseq
  %v1756 = vshrl.u32 %v1755, 7
  %v1757 = vsub.s32 0, %v1756
  %v1758 = vrot.slane %v1753, %v1757
  %v1760 = vmul.f32 %v1751, %v1758
  %v1761 = vmul.f32 %v1752, %v1758
  %v1762 = vsel %vm1575, %v1760, 0.0
  %1763 = vadd.xlane.f32.xlu0 %v1762
  %v1764 = vpop.xlane.xlu0 %1763
  %v1765 = vsel %vm1575, %v1761, 0.0
  %1766 = vadd.xlane.f32.xlu0 %v1765
  %v1767 = vpop.xlane.xlu0 %1766
  %v1768 = vld [vmem:[#allocation2] sm:$0x1]
  %v1770 = vlaneseq
  %v1771 = vshrl.u32 %v1770, 7
  %v1772 = vsub.s32 0, %v1771
  %v1773 = vrot.slane %v1768, %v1772
  %v1775 = vadd.f32 %v1764, %v1773
  %v1776 = vadd.f32 %v1767, %v1773
  %v1777 = vmax.f32 %v1775, 0.0
  %v1778 = vmax.f32 %v1776, 0.0
  %vm1779 = vcmask 7168
  %1780 = vst.msk [vmem:[%s14] sm:$0xff] %vm1779, %v1777
  %1781 = vst.msk [vmem:[%s14 + $0x8] sm:$0xff] %vm1779, %v1778
  // Predicated region
  $region58: #{generator_forward.1} parent=0 // pred_check
    _
  $region59: #{generator_forward.1} parent=0 // pred_check_branch
    %1783 = sbr.rel (0) target = $region61
  $region60: #{generator_forward.1} parent=0 // pred_region
    _
  $region61: #{generator_forward.1} parent=0 // pred_fallthru
    _
  // Predicated region
  $region62: #{generator_forward.1} parent=0 // pred_check
    _
  $region63: #{generator_forward.1} parent=0 // pred_check_branch
    %1785 = sbr.rel (0) target = $region65
  $region64: #{generator_forward.1} parent=0 // pred_region
    _
  $region65: #{generator_forward.1} parent=0 // pred_fallthru
    _

</llo_original>
